<compile_context>
chip_gen: v5e
topology: v5e:2x2
jax: 0.10.0
libtpu: 0.0.40
codegen_flags: <defaults>
</compile_context>

<pallas_src>
import functools

import numpy as np
import jax
import jax.numpy as jnp
from jax import lax
from jax.experimental import pallas as pl
from jax.experimental.pallas import tpu as pltpu


# ----------------------------------------------------------------------------- kernel

def fused_transformer_kernel(
    x_ref,        # (1, S, D)   f32  input activations (read only at layer 0)
    wqkv_ref,     # (1, D, 3D)  bf16 fused q/k/v weights (in, out)
    w1_ref,       # (1, D, Hd)  bf16 FFN first linear
    w2_ref,       # (1, Hd, D)  bf16 FFN second linear
    vec_ref,      # (1, 8, Vmax) f32 packed vectors: g1,be1,bv,g2,be2,b2,b1,pad
    xout_ref,     # (1, S, D)   f32  residual carry, resident in VMEM across layers
    attn_ref,     # (1, H, S, S) f32 attention map for this (layer, batch)
    *, nhead, d_k, d_model, scale, eps,
):
    layer = pl.program_id(1)
    D = d_model
    cdt = jnp.bfloat16

    # Initialize the layer carry from the input at the first layer of each batch row.
    @pl.when(layer == 0)
    def _():
        xout_ref[...] = x_ref[...]

    x = xout_ref[0]                               # (S, D) f32 carry

    vecs = vec_ref[0]                             # (8, Vmax) f32
    g1, be1 = vecs[0:1, :D], vecs[1:2, :D]
    bv = vecs[2:3, :D]
    g2, be2 = vecs[3:4, :D], vecs[4:5, :D]
    b2 = vecs[5:6, :D]
    b1 = vecs[6:7, :]                             # (1, Hd)

    # ---- LayerNorm 1 (f32, biased variance, eps=1e-5, affine)
    mu = jnp.mean(x, axis=-1, keepdims=True)
    var = jnp.mean((x - mu) ** 2, axis=-1, keepdims=True)
    xn = (x - mu) * lax.rsqrt(var + eps) * g1 + be1

    # ---- fused QKV projection: one bf16 MXU matmul, f32 accumulation
    qkv = jnp.dot(xn.astype(cdt), wqkv_ref[0],
                  preferred_element_type=jnp.float32)          # (S, 3D)
    q = qkv[:, :D] * scale                                     # fold 1/sqrt(d_k) into q
    k = qkv[:, D:2 * D]
    v = qkv[:, 2 * D:] + bv                                    # v has a bias

    S = q.shape[0]
    # (S, D) -> (H, S, d_k) head layout for batched matmuls
    qh = q.reshape(S, nhead, d_k).transpose(1, 0, 2).astype(cdt)
    kh = k.reshape(S, nhead, d_k).transpose(1, 0, 2).astype(cdt)
    vh = v.reshape(S, nhead, d_k).transpose(1, 0, 2).astype(cdt)

    # ---- batched per-head attention scores + softmax (over j)
    s = jnp.einsum('hid,hjd->hij', qh, kh,
                   preferred_element_type=jnp.float32)         # (H, S, S)
    s = s - jnp.max(s, axis=-1, keepdims=True)
    e = jnp.exp(s)
    attn = e * pl.reciprocal(jnp.sum(e, axis=-1, keepdims=True), approx=True)
    attn_ref[0] = attn                                         # lane-dense (H, S, S) store

    # ---- attention output + residual
    o = jnp.einsum('hij,hjd->hid', attn.astype(cdt), vh,
                   preferred_element_type=jnp.float32)         # (H, S, d_k)
    attn_out = o.transpose(1, 0, 2).reshape(S, D)              # 'i h d -> i (h d)'
    x2 = attn_out + x

    # ---- LayerNorm 2
    mu2 = jnp.mean(x2, axis=-1, keepdims=True)
    var2 = jnp.mean((x2 - mu2) ** 2, axis=-1, keepdims=True)
    xn2 = (x2 - mu2) * lax.rsqrt(var2 + eps) * g2 + be2

    # ---- FeedForward: Linear -> exact-erf GELU -> Linear (dropout = 0.0)
    h1 = jnp.dot(xn2.astype(cdt), w1_ref[0],
                 preferred_element_type=jnp.float32) + b1
    h1 = 0.5 * h1 * (1.0 + lax.erf(h1 * 0.7071067811865476))
    ff = jnp.dot(h1.astype(cdt), w2_ref[0],
                 preferred_element_type=jnp.float32) + b2

    xout_ref[0] = ff + x2                                      # residual; carried to next layer


# ----------------------------------------------------------------------------- wrapper

def _build_stacked_params(layer_params, d_model, hidden_dim):
    D, Hd = d_model, hidden_dim
    vmax = max(D, Hd)

    def pad_vec(v):
        v = v.reshape(-1)
        return jnp.pad(v, (0, vmax - v.shape[0]))

    wqkv, w1, w2, vecs = [], [], [], []
    for p in layer_params:
        wqkv.append(jnp.concatenate([p["wq"], p["wk"], p["wv"]], axis=1))
        w1.append(p["w1"])
        w2.append(p["w2"])
        vecs.append(jnp.stack([
            pad_vec(p["g1"]), pad_vec(p["be1"]), pad_vec(p["bv"]),
            pad_vec(p["g2"]), pad_vec(p["be2"]), pad_vec(p["b2"]),
            pad_vec(p["b1"]), jnp.zeros((vmax,), jnp.float32),
        ]))
    wqkv = jnp.stack(wqkv).astype(jnp.bfloat16)   # (L, D, 3D)
    w1 = jnp.stack(w1).astype(jnp.bfloat16)       # (L, D, Hd)
    w2 = jnp.stack(w2).astype(jnp.bfloat16)       # (L, Hd, D)
    vecs = jnp.stack(vecs)                        # (L, 8, Vmax) f32
    return wqkv, w1, w2, vecs, vmax


def transformer_forward(x, layer_params, nhead):
    """Full transformer stack in one fused Pallas kernel; grid = (batch, layers)."""
    B, S, D = x.shape
    L = len(layer_params)
    Hd = layer_params[0]["w1"].shape[1]
    d_k = D // nhead

    wqkv, w1, w2, vecs, vmax = _build_stacked_params(layer_params, D, Hd)

    kernel = functools.partial(
        fused_transformer_kernel,
        nhead=nhead, d_k=d_k, d_model=D,
        scale=1.0 / float(np.sqrt(d_k)), eps=1e-5,
    )

    in_specs = [
        pl.BlockSpec((1, S, D), lambda b, l: (b, 0, 0)),          # x
        pl.BlockSpec((1, D, 3 * D), lambda b, l: (l, 0, 0)),      # fused qkv weights
        pl.BlockSpec((1, D, Hd), lambda b, l: (l, 0, 0)),         # ffn w1
        pl.BlockSpec((1, Hd, D), lambda b, l: (l, 0, 0)),         # ffn w2
        pl.BlockSpec((1, 8, vmax), lambda b, l: (l, 0, 0)),       # packed small vectors
    ]
    out_specs = (
        # x carry: same block across the layer axis -> resident accumulator in VMEM
        pl.BlockSpec((1, S, D), lambda b, l: (b, 0, 0)),
        # attention maps, lane-dense (H, S, S) block per (layer, batch)
        pl.BlockSpec((1, nhead, S, S), lambda b, l: (l * B + b, 0, 0, 0)),
    )
    out_shape = (
        jax.ShapeDtypeStruct((B, S, D), jnp.float32),
        jax.ShapeDtypeStruct((L * B, nhead, S, S), jnp.float32),
    )

    y, attn_all = pl.pallas_call(
        kernel,
        grid=(B, L),
        in_specs=in_specs,
        out_specs=out_specs,
        out_shape=out_shape,
        compiler_params=pltpu.CompilerParams(
            dimension_semantics=("parallel", "arbitrary"),
            vmem_limit_bytes=32 * 1024 * 1024,
        ),
    )(x, wqkv, w1, w2, vecs)

    # Back to the module's per-layer (b, i, j, h) attention-map layout.
    attn_all = attn_all.reshape(L, B, nhead, S, S)
    attn_maps = [jnp.transpose(attn_all[i], (0, 2, 3, 1)) for i in range(L)]
    return y, attn_maps


# --------------------------------------------------------------------- pure-JAX reference

def reference_forward(x, layer_params, nhead):
    B, S, D = x.shape
    d_k = D // nhead
    scale = 1.0 / np.sqrt(d_k)

    def ln(z, g, b):
        mu = jnp.mean(z, axis=-1, keepdims=True)
        var = jnp.mean((z - mu) ** 2, axis=-1, keepdims=True)
        return (z - mu) * lax.rsqrt(var + 1e-5) * g[0] + b[0]

    attn_maps = []
    for p in layer_params:
        xn = ln(x, p["g1"], p["be1"])
        q = (xn @ p["wq"]).reshape(B, S, nhead, d_k)
        k = (xn @ p["wk"]).reshape(B, S, nhead, d_k)
        v = (xn @ p["wv"] + p["bv"][0]).reshape(B, S, nhead, d_k)
        scores = jnp.einsum("bihd,bjhd->bijh", q, k) * scale
        attn = jax.nn.softmax(scores, axis=2)
        attn_maps.append(attn)
        out = jnp.einsum("bijh,bjhd->bihd", attn, v).reshape(B, S, D)
        x = out + x
        xn2 = ln(x, p["g2"], p["be2"])
        h1 = xn2 @ p["w1"] + p["b1"][0]
        h1 = 0.5 * h1 * (1.0 + lax.erf(h1 * 0.7071067811865476))
        x = h1 @ p["w2"] + p["b2"][0] + x
    return x, attn_maps


# ----------------------------------------------------------------------------- main

def make_layer_params(key, d_model, hidden_scale):
    hd = d_model * hidden_scale
    ks = jax.random.split(key, 12)
    n = lambda k, shape, s=0.05: s * jax.random.normal(k, shape, jnp.float32)
    return {
        "g1": 1.0 + n(ks[0], (1, d_model), 0.1),
        "be1": n(ks[1], (1, d_model), 0.1),
        "wq": n(ks[2], (d_model, d_model)),
        "wk": n(ks[3], (d_model, d_model)),
        "wv": n(ks[4], (d_model, d_model)),
        "bv": n(ks[5], (1, d_model), 0.1),
        "g2": 1.0 + n(ks[6], (1, d_model), 0.1),
        "be2": n(ks[7], (1, d_model), 0.1),
        "w1": n(ks[8], (d_model, hd)),
        "b1": n(ks[9], (1, hd), 0.1),
        "w2": n(ks[10], (hd, d_model)),
        "b2": n(ks[11], (1, d_model), 0.1),
    }


if __name__ == "__main__":
    B, S, D = 2, 8, 32
    nhead, num_layers, hidden_scale = 4, 2, 4

    root = jax.random.PRNGKey(0)
    kx, *lkeys = jax.random.split(root, num_layers + 1)
    x = jax.random.normal(kx, (B, S, D), jnp.float32)
    layer_params = [make_layer_params(k, D, hidden_scale) for k in lkeys]

    y, attn_maps = transformer_forward(x, layer_params, nhead)
    y = jax.block_until_ready(y)
    attn_maps = [jax.block_until_ready(a) for a in attn_maps]

    # sanity check against pure-JAX f32 reference (kernel matmuls are bf16-in/f32-acc)
    y_ref, attn_ref = reference_forward(x, layer_params, nhead)
    assert y.shape == (B, S, D)
    assert all(a.shape == (B, S, S, nhead) for a in attn_maps)
    np.testing.assert_allclose(np.asarray(y), np.asarray(y_ref), rtol=2e-2, atol=2e-2)
    for a, ar in zip(attn_maps, attn_ref):
        np.testing.assert_allclose(np.asarray(a), np.asarray(ar), rtol=2e-2, atol=2e-2)

    print("KERNEL_OK")
</pallas_src>

<mosaic_0001>
module attributes {stable_mosaic.version = 11 : i64} {
  func.func @fused_transformer_kernel(%arg0: i32, %arg1: i32, %arg2: memref<1x8x32xf32, #tpu.memory_space<vmem>>, %arg3: memref<1x32x96xbf16, #tpu.memory_space<vmem>>, %arg4: memref<1x32x128xbf16, #tpu.memory_space<vmem>>, %arg5: memref<1x128x32xbf16, #tpu.memory_space<vmem>>, %arg6: memref<1x8x128xf32, #tpu.memory_space<vmem>>, %arg7: memref<1x8x32xf32, #tpu.memory_space<vmem>>, %arg8: memref<1x4x8x8xf32, #tpu.memory_space<vmem>>) attributes {dimension_semantics = [#tpu.dimension_semantics<parallel>, #tpu.dimension_semantics<arbitrary>], iteration_bounds = array<i64: 2, 2>, scalar_prefetch = 0 : i64, scratch_operands = 0 : i64, tpu.core_type = #tpu.core_type<tc>, window_params = [{transform_indices = @transform_0, window_bounds = array<i64: 1, 8, 32>}, {transform_indices = @transform_1, window_bounds = array<i64: 1, 32, 96>}, {transform_indices = @transform_2, window_bounds = array<i64: 1, 32, 128>}, {transform_indices = @transform_3, window_bounds = array<i64: 1, 128, 32>}, {transform_indices = @transform_4, window_bounds = array<i64: 1, 8, 128>}, {transform_indices = @transform_5, window_bounds = array<i64: 1, 8, 32>}, {transform_indices = @transform_6, window_bounds = array<i64: 1, 4, 8, 8>}]} {
    %c0_i32 = arith.constant 0 : i32
    %0 = arith.cmpi eq, %arg1, %c0_i32 : i32
    %1 = arith.extui %0 : i1 to i32
    %c0_i32_0 = arith.constant 0 : i32
    %2 = arith.cmpi ne, %1, %c0_i32_0 : i32
    scf.if %2 {
      %c0_42 = arith.constant 0 : index
      %c0_43 = arith.constant 0 : index
      %c0_44 = arith.constant 0 : index
      %121 = vector.load %arg2[%c0_42, %c0_43, %c0_44] : memref<1x8x32xf32, #tpu.memory_space<vmem>>, vector<1x8x32xf32>
      %c0_45 = arith.constant 0 : index
      %c0_46 = arith.constant 0 : index
      %c0_47 = arith.constant 0 : index
      %122 = vector.load %arg7[%c0_45, %c0_46, %c0_47] : memref<1x8x32xf32, #tpu.memory_space<vmem>>, vector<1x8x32xf32>
      tpu.vector_store %arg7[%c0_45, %c0_46, %c0_47], %121 {strides = array<i32>} : memref<1x8x32xf32, #tpu.memory_space<vmem>>, vector<1x8x32xf32>,
    } else {
    }
    %c0 = arith.constant 0 : index
    %c0_1 = arith.constant 0 : index
    %c0_2 = arith.constant 0 : index
    %3 = vector.load %arg7[%c0, %c0_1, %c0_2] : memref<1x8x32xf32, #tpu.memory_space<vmem>>, vector<1x8x32xf32>
    %4 = vector.shape_cast %3 : vector<1x8x32xf32> to vector<8x32xf32>
    %c0_3 = arith.constant 0 : index
    %c0_4 = arith.constant 0 : index
    %c0_5 = arith.constant 0 : index
    %5 = vector.load %arg6[%c0_3, %c0_4, %c0_5] : memref<1x8x128xf32, #tpu.memory_space<vmem>>, vector<1x8x128xf32>
    %6 = vector.shape_cast %5 : vector<1x8x128xf32> to vector<8x128xf32>
    %7 = vector.extract_strided_slice %6 {offsets = [0, 0], sizes = [1, 32], strides = [1, 1]} : vector<8x128xf32> to vector<1x32xf32>
    %8 = vector.extract_strided_slice %6 {offsets = [1, 0], sizes = [1, 32], strides = [1, 1]} : vector<8x128xf32> to vector<1x32xf32>
    %9 = vector.extract_strided_slice %6 {offsets = [2, 0], sizes = [1, 32], strides = [1, 1]} : vector<8x128xf32> to vector<1x32xf32>
    %10 = vector.extract_strided_slice %6 {offsets = [3, 0], sizes = [1, 32], strides = [1, 1]} : vector<8x128xf32> to vector<1x32xf32>
    %11 = vector.extract_strided_slice %6 {offsets = [4, 0], sizes = [1, 32], strides = [1, 1]} : vector<8x128xf32> to vector<1x32xf32>
    %12 = vector.extract_strided_slice %6 {offsets = [5, 0], sizes = [1, 32], strides = [1, 1]} : vector<8x128xf32> to vector<1x32xf32>
    %13 = vector.extract_strided_slice %6 {offsets = [6, 0], sizes = [1, 128], strides = [1, 1]} : vector<8x128xf32> to vector<1x128xf32>
    %cst = arith.constant dense<0.000000e+00> : vector<8xf32>
    %14 = vector.multi_reduction <add>, %4, %cst [1] : vector<8x32xf32> to vector<8xf32>
    %15 = vector.shape_cast %14 : vector<8xf32> to vector<8x1xf32>
    %cst_6 = arith.constant 3.200000e+01 : f32
    %16 = vector.broadcast %cst_6 : f32 to vector<8x1xf32>
    %17 = arith.divf %15, %16 : vector<8x1xf32>
    %18 = vector.broadcast %17 : vector<8x1xf32> to vector<8x32xf32>
    %19 = arith.subf %4, %18 : vector<8x32xf32>
    %20 = arith.mulf %19, %19 : vector<8x32xf32>
    %cst_7 = arith.constant dense<0.000000e+00> : vector<8xf32>
    %21 = vector.multi_reduction <add>, %20, %cst_7 [1] : vector<8x32xf32> to vector<8xf32>
    %22 = vector.shape_cast %21 : vector<8xf32> to vector<8x1xf32>
    %cst_8 = arith.constant 3.200000e+01 : f32
    %23 = vector.broadcast %cst_8 : f32 to vector<8x1xf32>
    %24 = arith.divf %22, %23 : vector<8x1xf32>
    %25 = vector.broadcast %17 : vector<8x1xf32> to vector<8x32xf32>
    %26 = arith.subf %4, %25 : vector<8x32xf32>
    %cst_9 = arith.constant 9.99999974E-6 : f32
    %27 = vector.broadcast %cst_9 : f32 to vector<8x1xf32>
    %28 = arith.addf %24, %27 : vector<8x1xf32>
    %29 = math.rsqrt %28 : vector<8x1xf32>
    %30 = vector.broadcast %29 : vector<8x1xf32> to vector<8x32xf32>
    %31 = arith.mulf %26, %30 : vector<8x32xf32>
    %32 = vector.broadcast %7 : vector<1x32xf32> to vector<8x32xf32>
    %33 = arith.mulf %31, %32 : vector<8x32xf32>
    %34 = vector.broadcast %8 : vector<1x32xf32> to vector<8x32xf32>
    %35 = arith.addf %33, %34 : vector<8x32xf32>
    %36 = arith.truncf %35 : vector<8x32xf32> to vector<8x32xbf16>
    %c0_10 = arith.constant 0 : index
    %c0_11 = arith.constant 0 : index
    %c0_12 = arith.constant 0 : index
    %37 = vector.load %arg3[%c0_10, %c0_11, %c0_12] : memref<1x32x96xbf16, #tpu.memory_space<vmem>>, vector<1x32x96xbf16>
    %38 = vector.shape_cast %37 : vector<1x32x96xbf16> to vector<32x96xbf16>
    %cst_13 = arith.constant dense<0.000000e+00> : vector<8x96xf32>
    %39 = tpu.matmul %36, %38, %cst_13 {dimension_numbers = #tpu.dot_dimension_numbers<[1], [0], [0], [1], [0, 0, 1, 1], [], []>} : vector<8x32xbf16>, vector<32x96xbf16>, vector<8x96xf32> -> vector<8x96xf32>
    %40 = vector.extract_strided_slice %39 {offsets = [0, 0], sizes = [8, 32], strides = [1, 1]} : vector<8x96xf32> to vector<8x32xf32>
    %cst_14 = arith.constant 0.353553385 : f32
    %41 = vector.broadcast %cst_14 : f32 to vector<8x32xf32>
    %42 = arith.mulf %40, %41 : vector<8x32xf32>
    %43 = vector.extract_strided_slice %39 {offsets = [0, 32], sizes = [8, 32], strides = [1, 1]} : vector<8x96xf32> to vector<8x32xf32>
    %44 = vector.extract_strided_slice %39 {offsets = [0, 64], sizes = [8, 32], strides = [1, 1]} : vector<8x96xf32> to vector<8x32xf32>
    %45 = vector.broadcast %9 : vector<1x32xf32> to vector<8x32xf32>
    %46 = arith.addf %44, %45 : vector<8x32xf32>
    %47 = vector.shape_cast %42 : vector<8x32xf32> to vector<8x4x8xf32>
    %48 = tpu.transpose %47, [1, 0, 2] : vector<8x4x8xf32> -> vector<4x8x8xf32>
    %49 = arith.truncf %48 : vector<4x8x8xf32> to vector<4x8x8xbf16>
    %50 = vector.shape_cast %43 : vector<8x32xf32> to vector<8x4x8xf32>
    %51 = tpu.transpose %50, [1, 0, 2] : vector<8x4x8xf32> -> vector<4x8x8xf32>
    %52 = arith.truncf %51 : vector<4x8x8xf32> to vector<4x8x8xbf16>
    %53 = vector.shape_cast %46 : vector<8x32xf32> to vector<8x4x8xf32>
    %54 = tpu.transpose %53, [1, 0, 2] : vector<8x4x8xf32> -> vector<4x8x8xf32>
    %55 = arith.truncf %54 : vector<4x8x8xf32> to vector<4x8x8xbf16>
    "tpu.trace_start"() <{level = 10 : i32, message = "hid,hjd->hij"}> : () -> ()
    %cst_15 = arith.constant dense<0.000000e+00> : vector<4x8x8xf32>
    %56 = tpu.matmul %49, %52, %cst_15 {dimension_numbers = #tpu.dot_dimension_numbers<[2], [2], [1], [1], [0, 0, 0, 1, 1, 1], [0], [0]>} : vector<4x8x8xbf16>, vector<4x8x8xbf16>, vector<4x8x8xf32> -> vector<4x8x8xf32>
    "tpu.trace_stop"() : () -> ()
    %cst_16 = arith.constant dense<0xFF800000> : vector<4x8xf32>
    %57 = vector.multi_reduction <maximumf>, %56, %cst_16 [2] : vector<4x8x8xf32> to vector<4x8xf32>
    %58 = vector.shape_cast %57 : vector<4x8xf32> to vector<4x8x1xf32>
    %59 = vector.broadcast %58 : vector<4x8x1xf32> to vector<4x8x8xf32>
    %60 = arith.subf %56, %59 : vector<4x8x8xf32>
    %61 = math.exp %60 : vector<4x8x8xf32>
    %cst_17 = arith.constant dense<0.000000e+00> : vector<4x8xf32>
    %62 = vector.multi_reduction <add>, %61, %cst_17 [2] : vector<4x8x8xf32> to vector<4x8xf32>
    %63 = vector.shape_cast %62 : vector<4x8xf32> to vector<4x8x1xf32>
    %64 = tpu.reciprocal %63 {approx = true} : vector<4x8x1xf32> -> vector<4x8x1xf32>
    %65 = vector.broadcast %64 : vector<4x8x1xf32> to vector<4x8x8xf32>
    %66 = arith.mulf %61, %65 : vector<4x8x8xf32>
    %c0_18 = arith.constant 0 : index
    %c0_19 = arith.constant 0 : index
    %c0_20 = arith.constant 0 : index
    %c0_21 = arith.constant 0 : index
    %67 = vector.load %arg8[%c0_18, %c0_19, %c0_20, %c0_21] : memref<1x4x8x8xf32, #tpu.memory_space<vmem>>, vector<1x4x8x8xf32>
    %68 = vector.shape_cast %67 : vector<1x4x8x8xf32> to vector<4x8x8xf32>
    %69 = vector.shape_cast %66 : vector<4x8x8xf32> to vector<1x4x8x8xf32>
    tpu.vector_store %arg8[%c0_18, %c0_19, %c0_20, %c0_21], %69 {strides = array<i32>} : memref<1x4x8x8xf32, #tpu.memory_space<vmem>>, vector<1x4x8x8xf32>,
    %70 = arith.truncf %66 : vector<4x8x8xf32> to vector<4x8x8xbf16>
    "tpu.trace_start"() <{level = 10 : i32, message = "hij,hjd->hid"}> : () -> ()
    %cst_22 = arith.constant dense<0.000000e+00> : vector<4x8x8xf32>
    %71 = tpu.matmul %70, %55, %cst_22 {dimension_numbers = #tpu.dot_dimension_numbers<[2], [1], [1], [2], [0, 0, 0, 1, 1, 2], [0], [0]>} : vector<4x8x8xbf16>, vector<4x8x8xbf16>, vector<4x8x8xf32> -> vector<4x8x8xf32>
    "tpu.trace_stop"() : () -> ()
    %72 = tpu.transpose %71, [1, 0, 2] : vector<4x8x8xf32> -> vector<8x4x8xf32>
    %73 = vector.shape_cast %72 : vector<8x4x8xf32> to vector<8x32xf32>
    %74 = arith.addf %73, %4 : vector<8x32xf32>
    %cst_23 = arith.constant dense<0.000000e+00> : vector<8xf32>
    %75 = vector.multi_reduction <add>, %74, %cst_23 [1] : vector<8x32xf32> to vector<8xf32>
    %76 = vector.shape_cast %75 : vector<8xf32> to vector<8x1xf32>
    %cst_24 = arith.constant 3.200000e+01 : f32
    %77 = vector.broadcast %cst_24 : f32 to vector<8x1xf32>
    %78 = arith.divf %76, %77 : vector<8x1xf32>
    %79 = vector.broadcast %78 : vector<8x1xf32> to vector<8x32xf32>
    %80 = arith.subf %74, %79 : vector<8x32xf32>
    %81 = arith.mulf %80, %80 : vector<8x32xf32>
    %cst_25 = arith.constant dense<0.000000e+00> : vector<8xf32>
    %82 = vector.multi_reduction <add>, %81, %cst_25 [1] : vector<8x32xf32> to vector<8xf32>
    %83 = vector.shape_cast %82 : vector<8xf32> to vector<8x1xf32>
    %cst_26 = arith.constant 3.200000e+01 : f32
    %84 = vector.broadcast %cst_26 : f32 to vector<8x1xf32>
    %85 = arith.divf %83, %84 : vector<8x1xf32>
    %86 = vector.broadcast %78 : vector<8x1xf32> to vector<8x32xf32>
    %87 = arith.subf %74, %86 : vector<8x32xf32>
    %cst_27 = arith.constant 9.99999974E-6 : f32
    %88 = vector.broadcast %cst_27 : f32 to vector<8x1xf32>
    %89 = arith.addf %85, %88 : vector<8x1xf32>
    %90 = math.rsqrt %89 : vector<8x1xf32>
    %91 = vector.broadcast %90 : vector<8x1xf32> to vector<8x32xf32>
    %92 = arith.mulf %87, %91 : vector<8x32xf32>
    %93 = vector.broadcast %10 : vector<1x32xf32> to vector<8x32xf32>
    %94 = arith.mulf %92, %93 : vector<8x32xf32>
    %95 = vector.broadcast %11 : vector<1x32xf32> to vector<8x32xf32>
    %96 = arith.addf %94, %95 : vector<8x32xf32>
    %97 = arith.truncf %96 : vector<8x32xf32> to vector<8x32xbf16>
    %c0_28 = arith.constant 0 : index
    %c0_29 = arith.constant 0 : index
    %c0_30 = arith.constant 0 : index
    %98 = vector.load %arg4[%c0_28, %c0_29, %c0_30] : memref<1x32x128xbf16, #tpu.memory_space<vmem>>, vector<1x32x128xbf16>
    %99 = vector.shape_cast %98 : vector<1x32x128xbf16> to vector<32x128xbf16>
    %cst_31 = arith.constant dense<0.000000e+00> : vector<8x128xf32>
    %100 = tpu.matmul %97, %99, %cst_31 {dimension_numbers = #tpu.dot_dimension_numbers<[1], [0], [0], [1], [0, 0, 1, 1], [], []>} : vector<8x32xbf16>, vector<32x128xbf16>, vector<8x128xf32> -> vector<8x128xf32>
    %101 = vector.broadcast %13 : vector<1x128xf32> to vector<8x128xf32>
    %102 = arith.addf %100, %101 : vector<8x128xf32>
    %cst_32 = arith.constant 5.000000e-01 : f32
    %103 = vector.broadcast %cst_32 : f32 to vector<8x128xf32>
    %104 = arith.mulf %103, %102 : vector<8x128xf32>
    %cst_33 = arith.constant 0.707106769 : f32
    %105 = vector.broadcast %cst_33 : f32 to vector<8x128xf32>
    %106 = arith.mulf %102, %105 : vector<8x128xf32>
    %107 = math.erf %106 : vector<8x128xf32>
    %cst_34 = arith.constant 1.000000e+00 : f32
    %108 = vector.broadcast %cst_34 : f32 to vector<8x128xf32>
    %109 = arith.addf %108, %107 : vector<8x128xf32>
    %110 = arith.mulf %104, %109 : vector<8x128xf32>
    %111 = arith.truncf %110 : vector<8x128xf32> to vector<8x128xbf16>
    %c0_35 = arith.constant 0 : index
    %c0_36 = arith.constant 0 : index
    %c0_37 = arith.constant 0 : index
    %112 = vector.load %arg5[%c0_35, %c0_36, %c0_37] : memref<1x128x32xbf16, #tpu.memory_space<vmem>>, vector<1x128x32xbf16>
    %113 = vector.shape_cast %112 : vector<1x128x32xbf16> to vector<128x32xbf16>
    %cst_38 = arith.constant dense<0.000000e+00> : vector<8x32xf32>
    %114 = tpu.matmul %111, %113, %cst_38 {dimension_numbers = #tpu.dot_dimension_numbers<[1], [0], [0], [1], [0, 0, 1, 1], [], []>} : vector<8x128xbf16>, vector<128x32xbf16>, vector<8x32xf32> -> vector<8x32xf32>
    %115 = vector.broadcast %12 : vector<1x32xf32> to vector<8x32xf32>
    %116 = arith.addf %114, %115 : vector<8x32xf32>
    %117 = arith.addf %116, %74 : vector<8x32xf32>
    %c0_39 = arith.constant 0 : index
    %c0_40 = arith.constant 0 : index
    %c0_41 = arith.constant 0 : index
    %118 = vector.load %arg7[%c0_39, %c0_40, %c0_41] : memref<1x8x32xf32, #tpu.memory_space<vmem>>, vector<1x8x32xf32>
    %119 = vector.shape_cast %118 : vector<1x8x32xf32> to vector<8x32xf32>
    %120 = vector.shape_cast %117 : vector<8x32xf32> to vector<1x8x32xf32>
    tpu.vector_store %arg7[%c0_39, %c0_40, %c0_41], %120 {strides = array<i32>} : memref<1x8x32xf32, #tpu.memory_space<vmem>>, vector<1x8x32xf32>,
    return
  }
  func.func @transform_0(%arg0: i32, %arg1: i32) -> (i32, i32, i32) {
    %c0_i32 = arith.constant 0 : i32
    %c0_i32_0 = arith.constant 0 : i32
    %c0_i32_1 = arith.constant 0 : i32
    return %arg0, %c0_i32, %c0_i32_0 : i32, i32, i32
  }
  func.func @transform_1(%arg0: i32, %arg1: i32) -> (i32, i32, i32) {
    %c0_i32 = arith.constant 0 : i32
    %c0_i32_0 = arith.constant 0 : i32
    %c0_i32_1 = arith.constant 0 : i32
    return %arg1, %c0_i32, %c0_i32_0 : i32, i32, i32
  }
  func.func @transform_2(%arg0: i32, %arg1: i32) -> (i32, i32, i32) {
    %c0_i32 = arith.constant 0 : i32
    %c0_i32_0 = arith.constant 0 : i32
    %c0_i32_1 = arith.constant 0 : i32
    return %arg1, %c0_i32, %c0_i32_0 : i32, i32, i32
  }
  func.func @transform_3(%arg0: i32, %arg1: i32) -> (i32, i32, i32) {
    %c0_i32 = arith.constant 0 : i32
    %c0_i32_0 = arith.constant 0 : i32
    %c0_i32_1 = arith.constant 0 : i32
    return %arg1, %c0_i32, %c0_i32_0 : i32, i32, i32
  }
  func.func @transform_4(%arg0: i32, %arg1: i32) -> (i32, i32, i32) {
    %c0_i32 = arith.constant 0 : i32
    %c0_i32_0 = arith.constant 0 : i32
    %c0_i32_1 = arith.constant 0 : i32
    return %arg1, %c0_i32, %c0_i32_0 : i32, i32, i32
  }
  func.func @transform_5(%arg0: i32, %arg1: i32) -> (i32, i32, i32) {
    %c0_i32 = arith.constant 0 : i32
    %c0_i32_0 = arith.constant 0 : i32
    %c0_i32_1 = arith.constant 0 : i32
    return %arg0, %c0_i32, %c0_i32_0 : i32, i32, i32
  }
  func.func @transform_6(%arg0: i32, %arg1: i32) -> (i32, i32, i32, i32) {
    %c2_i32 = arith.constant 2 : i32
    %0 = arith.muli %arg1, %c2_i32 : i32
    %1 = arith.addi %0, %arg0 : i32
    %c0_i32 = arith.constant 0 : i32
    %c0_i32_0 = arith.constant 0 : i32
    %c0_i32_1 = arith.constant 0 : i32
    %c0_i32_2 = arith.constant 0 : i32
    return %1, %c0_i32, %c0_i32_0, %c0_i32_1 : i32, i32, i32, i32
  }
}

</mosaic_0001>

<llo_original>
// kernel: tpu_custom_call.1
$region0: #{tpu_custom_call.1}
  #allocation0 [shape = 'u32[]', space=smem, size = 0x4, offset = 0x4, fixed_abs, tag = 'smem constant byte address 0x4 - core index']
  #allocation1 [shape = 'u32[72,128]{1,0:T(1,128)}', space=vmem, size = 0x9000, scoped, tag = 'internal scratch']
  %s0 = inlined_call_operand.vmem [shape: f32[2,8,32], index: 0, kind: input, shape index: {}]
  %s1 = inlined_call_operand.vmem [shape: bf16[2,32,96], index: 1, kind: input, shape index: {}]
  %s2 = inlined_call_operand.vmem [shape: bf16[2,32,128], index: 2, kind: input, shape index: {}]
  %s3 = inlined_call_operand.vmem [shape: bf16[2,128,32], index: 3, kind: input, shape index: {}]
  %s4 = inlined_call_operand.vmem [shape: f32[2,8,128], index: 4, kind: input, shape index: {}]
  %s5 = inlined_call_operand.hbm [shape: f32[2,8,32], index: 5, kind: output, shape index: {0}]
  %s6 = inlined_call_operand.hbm [shape: f32[4,4,8,8], index: 6, kind: output, shape index: {1}]
  %7 = xla_tuple %s5, %s6
  %s8 = sld [smem:[#allocation0]]
  $region65: #{tpu_custom_call.1} parent=0
    _
  %s10 = ssub.s32 1, %s8
  %s11 = scalar_select 0, %s10, %s8
  $region1: #{tpu_custom_call.1} parent=0
    #allocation2 [shape = 'u8[8192]{0}', space=vmem, size = 0x2000, scoped, tag = 'output window, operand 0']
    #allocation3 [shape = 's32[2]{0}', space=sflag, size = 0x8, scoped, tag = 'scoped memory for tpu_custom_call.1']
    #allocation4 [shape = 'u8[32768]{0}', space=vmem, size = 0x8000, scoped, tag = 'output window, operand 1']
    #allocation5 [shape = 's32[2]{0}', space=sflag, size = 0x8, scoped, tag = 'scoped memory for tpu_custom_call.1']
    %12 = vsyncpa [#allocation3], 0
    %s13 = scalar_lea.sflag [#allocation3], 1
    %14 = vsyncpa %s13, 0
    %15 = vsyncpa [#allocation5], 0
    %s16 = scalar_lea.sflag [#allocation5], 1
    %17 = vsyncpa %s16, 0
    loop: start=0, step=1, limit=6
    $region2: #{tpu_custom_call.1} parent=1 // loop_pre_header
      _
    $region3: #{tpu_custom_call.1} parent=1 // loop_header
      %s19 = sphi 0, %s23
      %p20 = scmp.ge.s32.totalorder %s19, 6
      %s26 = sphi 0, %s38
      %s27 = sphi 0, %s34
      %s28 = sphi 0, %s26
      %s29 = sphi 0, %s27
      %s30 = sphi 0, %s28
      %s31 = sphi 0, %s29
      %s41 = sphi 0, %s43
      %s44 = sphi 0, %s41
      %s45 = sphi 0, %s44
      %s61 = sphi 0, %s45
      %s67 = sphi 0, %s69
      %s70 = sphi 0, %s67
      %s71 = sphi 0, %s70
      %s87 = sphi 0, %s71
      %s93 = sphi 0, %s95
      %s96 = sphi 0, %s93
      %s97 = sphi 0, %s96
      %s113 = sphi 0, %s97
      %s119 = sphi 0, %s121
      %s122 = sphi 0, %s119
      %s123 = sphi 0, %s122
      %s139 = sphi 0, %s123
      %s145 = sphi 0, %s147
      %s148 = sphi 0, %s145
      %s149 = sphi 0, %s148
      %s165 = sphi 0, %s149
      %s171 = sphi 0, %s173
      %s174 = sphi 0, %s171
      %s175 = sphi 0, %s174
      %s191 = sphi 0, %s175
      %s201 = sphi 0, %s203
      %s204 = sphi 0, %s201
      %s205 = sphi 0, %s204
      %s221 = sphi 0, %s205
    $region4: #{tpu_custom_call.1} parent=1 // loop_header_branch
      %22 = sbr.rel (%p20) target = $region8
    $region5: #{tpu_custom_call.1} parent=1 // loop_body
      %s24 = ssub.s32 %s19, 1
      %s25 = ssub.s32 %s19, 2
      %s32 = sadd.s32 1, %s27
      %p33 = scmp.ge.s32.totalorder %s32, 2
      %s34 = scalar_select %p33, 0, %s32
      %s35 = sadd.s32 1, %s26
      %s36 = scalar_select %p33, %s35, %s26
      %p37 = scmp.ge.s32.totalorder %s36, 2
      %s38 = scalar_select %p37, 0, %s36
      %s39 = ssub.s32 %s26, %s38
      %p40 = scmp.eq.s32.totalorder %s39, 0
      %s42 = sadd.s32 %s41, 1
      %s43 = scalar_select %p40, %s41, %s42
      %p46 = pneg %p40
      %p47 = scmp.eq.s32.totalorder %s19, 3
      %p48 = por %p46, %p47
      %p49 = scmp.ne.s32.totalorder %s41, %s44
      %p50 = scmp.eq.s32.totalorder %s19, 0
      %p51 = por %p49, %p50
      %p52 = scmp.ne.s32.totalorder %s41, %s44
      %p53 = scmp.eq.s32.totalorder %s24, 3
      %p54 = por %p52, %p53
      %p55 = scmp.ne.s32.totalorder %s44, %s45
      %p56 = scmp.eq.s32.totalorder %s24, 0
      %p57 = por %p55, %p56
      %p58 = scmp.ne.s32.totalorder %s44, %s45
      %p59 = scmp.eq.s32.totalorder %s25, 3
      %p60 = por %p58, %p59
      %p62 = scmp.ne.s32.totalorder %s45, %s61
      %p63 = scmp.eq.s32.totalorder %s25, 0
      %p64 = por %p62, %p63
      %s65 = ssub.s32 %s27, %s34
      %p66 = scmp.eq.s32.totalorder %s65, 0
      %s68 = sadd.s32 %s67, 1
      %s69 = scalar_select %p66, %s67, %s68
      %p72 = pneg %p66
      %p73 = scmp.eq.s32.totalorder %s19, 3
      %p74 = por %p72, %p73
      %p75 = scmp.ne.s32.totalorder %s67, %s70
      %p76 = scmp.eq.s32.totalorder %s19, 0
      %p77 = por %p75, %p76
      %p78 = scmp.ne.s32.totalorder %s67, %s70
      %p79 = scmp.eq.s32.totalorder %s24, 3
      %p80 = por %p78, %p79
      %p81 = scmp.ne.s32.totalorder %s70, %s71
      %p82 = scmp.eq.s32.totalorder %s24, 0
      %p83 = por %p81, %p82
      %p84 = scmp.ne.s32.totalorder %s70, %s71
      %p85 = scmp.eq.s32.totalorder %s25, 3
      %p86 = por %p84, %p85
      %p88 = scmp.ne.s32.totalorder %s71, %s87
      %p89 = scmp.eq.s32.totalorder %s25, 0
      %p90 = por %p88, %p89
      %s91 = ssub.s32 %s27, %s34
      %p92 = scmp.eq.s32.totalorder %s91, 0
      %s94 = sadd.s32 %s93, 1
      %s95 = scalar_select %p92, %s93, %s94
      %p98 = pneg %p92
      %p99 = scmp.eq.s32.totalorder %s19, 3
      %p100 = por %p98, %p99
      %p101 = scmp.ne.s32.totalorder %s93, %s96
      %p102 = scmp.eq.s32.totalorder %s19, 0
      %p103 = por %p101, %p102
      %p104 = scmp.ne.s32.totalorder %s93, %s96
      %p105 = scmp.eq.s32.totalorder %s24, 3
      %p106 = por %p104, %p105
      %p107 = scmp.ne.s32.totalorder %s96, %s97
      %p108 = scmp.eq.s32.totalorder %s24, 0
      %p109 = por %p107, %p108
      %p110 = scmp.ne.s32.totalorder %s96, %s97
      %p111 = scmp.eq.s32.totalorder %s25, 3
      %p112 = por %p110, %p111
      %p114 = scmp.ne.s32.totalorder %s97, %s113
      %p115 = scmp.eq.s32.totalorder %s25, 0
      %p116 = por %p114, %p115
      %s117 = ssub.s32 %s27, %s34
      %p118 = scmp.eq.s32.totalorder %s117, 0
      %s120 = sadd.s32 %s119, 1
      %s121 = scalar_select %p118, %s119, %s120
      %p124 = pneg %p118
      %p125 = scmp.eq.s32.totalorder %s19, 3
      %p126 = por %p124, %p125
      %p127 = scmp.ne.s32.totalorder %s119, %s122
      %p128 = scmp.eq.s32.totalorder %s19, 0
      %p129 = por %p127, %p128
      %p130 = scmp.ne.s32.totalorder %s119, %s122
      %p131 = scmp.eq.s32.totalorder %s24, 3
      %p132 = por %p130, %p131
      %p133 = scmp.ne.s32.totalorder %s122, %s123
      %p134 = scmp.eq.s32.totalorder %s24, 0
      %p135 = por %p133, %p134
      %p136 = scmp.ne.s32.totalorder %s122, %s123
      %p137 = scmp.eq.s32.totalorder %s25, 3
      %p138 = por %p136, %p137
      %p140 = scmp.ne.s32.totalorder %s123, %s139
      %p141 = scmp.eq.s32.totalorder %s25, 0
      %p142 = por %p140, %p141
      %s143 = ssub.s32 %s27, %s34
      %p144 = scmp.eq.s32.totalorder %s143, 0
      %s146 = sadd.s32 %s145, 1
      %s147 = scalar_select %p144, %s145, %s146
      %p150 = pneg %p144
      %p151 = scmp.eq.s32.totalorder %s19, 3
      %p152 = por %p150, %p151
      %p153 = scmp.ne.s32.totalorder %s145, %s148
      %p154 = scmp.eq.s32.totalorder %s19, 0
      %p155 = por %p153, %p154
      %p156 = scmp.ne.s32.totalorder %s145, %s148
      %p157 = scmp.eq.s32.totalorder %s24, 3
      %p158 = por %p156, %p157
      %p159 = scmp.ne.s32.totalorder %s148, %s149
      %p160 = scmp.eq.s32.totalorder %s24, 0
      %p161 = por %p159, %p160
      %p162 = scmp.ne.s32.totalorder %s148, %s149
      %p163 = scmp.eq.s32.totalorder %s25, 3
      %p164 = por %p162, %p163
      %p166 = scmp.ne.s32.totalorder %s149, %s165
      %p167 = scmp.eq.s32.totalorder %s25, 0
      %p168 = por %p166, %p167
      %s169 = ssub.s32 %s26, %s38
      %p170 = scmp.eq.s32.totalorder %s169, 0
      %s172 = sadd.s32 %s171, 1
      %s173 = scalar_select %p170, %s171, %s172
      %p176 = pneg %p170
      %p177 = scmp.eq.s32.totalorder %s19, 3
      %p178 = por %p176, %p177
      %p179 = scmp.ne.s32.totalorder %s171, %s174
      %p180 = scmp.eq.s32.totalorder %s19, 0
      %p181 = por %p179, %p180
      %p182 = scmp.ne.s32.totalorder %s171, %s174
      %p183 = scmp.eq.s32.totalorder %s24, 3
      %p184 = por %p182, %p183
      %p185 = scmp.ne.s32.totalorder %s174, %s175
      %p186 = scmp.eq.s32.totalorder %s24, 0
      %p187 = por %p185, %p186
      %p188 = scmp.ne.s32.totalorder %s174, %s175
      %p189 = scmp.eq.s32.totalorder %s25, 3
      %p190 = por %p188, %p189
      %p192 = scmp.ne.s32.totalorder %s175, %s191
      %p193 = scmp.eq.s32.totalorder %s25, 0
      %p194 = por %p192, %p193
      %s195 = smul.u32 %s27, 2
      %s196 = sadd.s32 %s195, %s26
      %s197 = smul.u32 %s34, 2
      %s198 = sadd.s32 %s197, %s38
      %s199 = ssub.s32 %s196, %s198
      %p200 = scmp.eq.s32.totalorder %s199, 0
      %s202 = sadd.s32 %s201, 1
      %s203 = scalar_select %p200, %s201, %s202
      %p206 = pneg %p200
      %p207 = scmp.eq.s32.totalorder %s19, 3
      %p208 = por %p206, %p207
      %p209 = scmp.ne.s32.totalorder %s201, %s204
      %p210 = scmp.eq.s32.totalorder %s19, 0
      %p211 = por %p209, %p210
      %p212 = scmp.ne.s32.totalorder %s201, %s204
      %p213 = scmp.eq.s32.totalorder %s24, 3
      %p214 = por %p212, %p213
      %p215 = scmp.ne.s32.totalorder %s204, %s205
      %p216 = scmp.eq.s32.totalorder %s24, 0
      %p217 = por %p215, %p216
      %p218 = scmp.ne.s32.totalorder %s204, %s205
      %p219 = scmp.eq.s32.totalorder %s25, 3
      %p220 = por %p218, %p219
      %p222 = scmp.ne.s32.totalorder %s205, %s221
      %p223 = scmp.eq.s32.totalorder %s25, 0
      %p224 = por %p222, %p223
      %p225 = scmp.le.s32.totalorder 1, %s19
      %p226 = scmp.lt.s32.totalorder %s19, 5
      %p227 = pnand %p225, %p226
      %p228 = pneg %p227
      // Predicated region
      $region9: #{tpu_custom_call.1} parent=5 // pred_check
        _
      $region10: #{tpu_custom_call.1} parent=5 // pred_check_branch
        %230 = sbr.rel (%p227) target = $region12
      $region11: #{tpu_custom_call.1} parent=5 // pred_region
        %s231 = ssub.s32 %s19, 1
      $region12: #{tpu_custom_call.1} parent=5 // pred_fallthru
        _
      %p232 = scmp.lt.s32.totalorder %s19, 4
      // Predicated region
      $region13: #{tpu_custom_call.1} parent=5 // pred_check
        %p233 = pneg %p232
      $region14: #{tpu_custom_call.1} parent=5 // pred_check_branch
        %235 = sbr.rel (%p233) target = $region16
      $region15: #{tpu_custom_call.1} parent=5 // pred_region
        // Predicated region
        $region17: #{tpu_custom_call.1} parent=15 // pred_check
          %p236 = pneg %p51
        $region18: #{tpu_custom_call.1} parent=15 // pred_check_branch
          %238 = sbr.rel (%p236) target = $region20
        $region19: #{tpu_custom_call.1} parent=15 // pred_region
          %p239 = scmp.lt.s32.totalorder %s26, 1
          %s240 = scalar_select %p239, %s26, 1
          %s241 = smul.addr %s240, 8
          %s242 = scalar_lea.vmem %s0, %s241
        $region20: #{tpu_custom_call.1} parent=15 // pred_fallthru
          _
        // Predicated region
        $region21: #{tpu_custom_call.1} parent=15 // pred_check
          %p243 = pneg %p77
        $region22: #{tpu_custom_call.1} parent=15 // pred_check_branch
          %245 = sbr.rel (%p243) target = $region24
        $region23: #{tpu_custom_call.1} parent=15 // pred_region
          %p246 = scmp.lt.s32.totalorder %s27, 1
          %s247 = scalar_select %p246, %s27, 1
          %s248 = smul.addr %s247, 4
          %s249 = smul.addr %s248, 4
          %s250 = scalar_lea.vmem %s1, %s249
        $region24: #{tpu_custom_call.1} parent=15 // pred_fallthru
          _
        // Predicated region
        $region25: #{tpu_custom_call.1} parent=15 // pred_check
          %p251 = pneg %p103
        $region26: #{tpu_custom_call.1} parent=15 // pred_check_branch
          %253 = sbr.rel (%p251) target = $region28
        $region27: #{tpu_custom_call.1} parent=15 // pred_region
          %p254 = scmp.lt.s32.totalorder %s27, 1
          %s255 = scalar_select %p254, %s27, 1
          %s256 = smul.addr %s255, 4
          %s257 = smul.addr %s256, 4
          %s258 = scalar_lea.vmem %s2, %s257
        $region28: #{tpu_custom_call.1} parent=15 // pred_fallthru
          _
        // Predicated region
        $region29: #{tpu_custom_call.1} parent=15 // pred_check
          %p259 = pneg %p129
        $region30: #{tpu_custom_call.1} parent=15 // pred_check_branch
          %261 = sbr.rel (%p259) target = $region32
        $region31: #{tpu_custom_call.1} parent=15 // pred_region
          %p262 = scmp.lt.s32.totalorder %s27, 1
          %s263 = scalar_select %p262, %s27, 1
          %s264 = smul.addr %s263, 16
          %s265 = smul.addr %s264, 4
          %s266 = scalar_lea.vmem %s3, %s265
        $region32: #{tpu_custom_call.1} parent=15 // pred_fallthru
          _
        // Predicated region
        $region33: #{tpu_custom_call.1} parent=15 // pred_check
          %p267 = pneg %p155
        $region34: #{tpu_custom_call.1} parent=15 // pred_check_branch
          %269 = sbr.rel (%p267) target = $region36
        $region35: #{tpu_custom_call.1} parent=15 // pred_region
          %p270 = scmp.lt.s32.totalorder %s27, 1
          %s271 = scalar_select %p270, %s27, 1
          %s272 = smul.addr %s271, 8
          %s273 = scalar_lea.vmem %s4, %s272
        $region36: #{tpu_custom_call.1} parent=15 // pred_fallthru
          _
      $region16: #{tpu_custom_call.1} parent=5 // pred_fallthru
        _
      %p274 = scmp.le.s32.totalorder 1, %s19
      %p275 = scmp.lt.s32.totalorder %s19, 5
      %p276 = pnand %p274, %p275
      %p277 = pneg %p276
      // Predicated region
      $region37: #{tpu_custom_call.1} parent=5 // pred_check
        _
      $region38: #{tpu_custom_call.1} parent=5 // pred_check_branch
        %279 = sbr.rel (%p276) target = $region40
      $region39: #{tpu_custom_call.1} parent=5 // pred_region
        %s280 = ssub.s32 %s19, 1
        %p281 = scmp.lt.s32.totalorder %s28, 1
        %s282 = scalar_select %p281, %s28, 1
        %s283 = smul.addr %s282, 8
        %s284 = scalar_lea.vmem %s0, %s283
        %p285 = pneg %p57
        %p286 = pneg %p54
        %p287 = scmp.lt.s32.totalorder %s29, 1
        %s288 = scalar_select %p287, %s29, 1
        %s289 = smul.addr %s288, 4
        %s290 = smul.addr %s289, 4
        %s291 = scalar_lea.vmem %s1, %s290
        %p292 = pneg %p83
        %p293 = pneg %p80
        %p294 = scmp.lt.s32.totalorder %s29, 1
        %s295 = scalar_select %p294, %s29, 1
        %s296 = smul.addr %s295, 4
        %s297 = smul.addr %s296, 4
        %s298 = scalar_lea.vmem %s2, %s297
        %p299 = pneg %p109
        %p300 = pneg %p106
        %p301 = scmp.lt.s32.totalorder %s29, 1
        %s302 = scalar_select %p301, %s29, 1
        %s303 = smul.addr %s302, 16
        %s304 = smul.addr %s303, 4
        %s305 = scalar_lea.vmem %s3, %s304
        %p306 = pneg %p135
        %p307 = pneg %p132
        %p308 = scmp.lt.s32.totalorder %s29, 1
        %s309 = scalar_select %p308, %s29, 1
        %s310 = smul.addr %s309, 8
        %s311 = scalar_lea.vmem %s4, %s310
        %p312 = pneg %p161
        %p313 = pneg %p158
        %p314 = pneg %p187
        %p315 = pneg %p184
        %s316 = sand.u32 %s174, 1
        %s317 = scalar_lea.sflag [#allocation3], %s316
        %s318 = sand.u32 %s174, 1
        %s319 = smul.addr %s318, 8
        %s320 = scalar_lea.vmem [#allocation2], %s319
        %p321 = pneg %p217
        %p322 = pneg %p214
        %s323 = sand.u32 %s204, 1
        %s324 = scalar_lea.sflag [#allocation5], %s323
        %s325 = sand.u32 %s204, 1
        %s326 = smul.addr %s325, 32
        %s327 = scalar_lea.vmem [#allocation4], %s326
        %p328 = scmp.lt.s32.totalorder %s28, 1
        %s329 = scalar_select %p328, %s28, 1
        %s330 = smul.addr %s329, 8
        %s331 = scalar_lea.vmem %s0, %s330
        %p332 = scmp.lt.s32.totalorder %s29, 1
        %s333 = scalar_select %p332, %s29, 1
        %s334 = smul.addr %s333, 4
        %s335 = smul.addr %s334, 4
        %s336 = scalar_lea.vmem %s1, %s335
        %p337 = scmp.lt.s32.totalorder %s29, 1
        %s338 = scalar_select %p337, %s29, 1
        %s339 = smul.addr %s338, 4
        %s340 = smul.addr %s339, 4
        %s341 = scalar_lea.vmem %s2, %s340
        %p342 = scmp.lt.s32.totalorder %s29, 1
        %s343 = scalar_select %p342, %s29, 1
        %s344 = smul.addr %s343, 16
        %s345 = smul.addr %s344, 4
        %s346 = scalar_lea.vmem %s3, %s345
        %p347 = scmp.lt.s32.totalorder %s29, 1
        %s348 = scalar_select %p347, %s29, 1
        %s349 = smul.addr %s348, 8
        %s350 = scalar_lea.vmem %s4, %s349
        %s351 = smul.u32 %s29, 2
        %s352 = sadd.s32 %s351, %s28
        %p354 = scmp.eq.s32.totalorder %s29, 0
        // Predicated region
        $region41: #{tpu_custom_call.1} parent=39 // pred_check
          %p355 = pneg %p354
        $region42: #{tpu_custom_call.1} parent=39 // pred_check_branch
          %357 = sbr.rel (%p355) target = $region44
        $region43: #{tpu_custom_call.1} parent=39 // pred_region
          %v358 = vld [vmem:[%s331] sm:$0xff]
          %vm359 = vcmask 261120
          %360 = vst.msk [vmem:[%s320] sm:$0xff] %vm359, %v358
        $region44: #{tpu_custom_call.1} parent=39 // pred_fallthru
          _
        %v361 = vld [vmem:[%s320] sm:$0xff]
        %v362 = vld [vmem:[%s350] sm:$0xff]
        %vm363 = vcmask 261120
        %v364 = vsel %vm363, %v361, 0.0
        %365 = vadd.xlane.f32.xlu0 %v364
        %v366 = vpop.xlane.xlu0 %365
        %v367 = vrcp.pop 32.0
        %v368 = vmul.f32 32.0, %v367
        %v369 = vsub.f32 1.0, %v368
        %v370 = vmul.f32 %v367, %v369
        %v371 = vadd.f32 %v367, %v370
        %vm372 = vweird.f32 %v367
        %v373 = vsel %vm372, %v367, %v371
        %v374 = vmul.f32 %v366, %v373
        %v375 = vsub.f32 %v361, %v374
        %v376 = vmul.f32 %v375, %v375
        %v377 = vsel %vm363, %v376, 0.0
        %378 = vadd.xlane.f32.xlu0 %v377
        %v379 = vpop.xlane.xlu0 %378
        %v380 = vmul.f32 %v379, %v373
        %v381 = vadd.f32 %v380, 1e-05
        %v382 = vrsqrt.pop %v381
        %v383 = vmul.f32 %v382, %v381
        %v384 = vmul.f32 %v383, %v382
        %v385 = vmul.f32 0.5, %v384
        %v386 = vsub.f32 1.5, %v385
        %v387 = vmul.f32 %v382, %v386
        %vm388 = vweird.f32 %v381
        %vm389 = vweird.f32 %v382
        %vm390 = vmor %vm388, %vm389
        %v391 = vsel %vm390, %v382, %v387
        %v392 = vmul.f32 %v375, %v391
        %v393 = vperm.slane %v362, 0
        %v394 = vmul.f32 %v392, %v393
        %v395 = vperm.slane %v362, 1
        %v396 = vadd.f32 %v394, %v395
        %v397 = vpack.c.bf16 %v396, %v396
        %v398 = vld [vmem:[%s336] sm:$0xf]
        %v399 = vld [vmem:[%s336 + $0x4] sm:$0xf]
        %v400 = vld [vmem:[%s336 + $0x8] sm:$0xf]
        %v401 = vld [vmem:[%s336 + $0xc] sm:$0xf]
        %v406 = vunpack.c.l.b16 %v398
        %v407 = vunpack.c.l.b16 %v399
        %v408 = vunpack.c.l.b16 %v400
        %v409 = vunpack.c.l.b16 %v401
        %v410 = vpack.c.b16 %v407, %v406
        %v411 = vpack.c.b16 %v409, %v408
        %v415 = vsel %vm363, %v397, 0
        %417 = vmatpush.bf16.msra.mxu0 0
        %418 = vmatpush.bf16.msra.mxu0 0
        %419 = vmatpush.bf16.msra.mxu0 0
        %420 = vmatpush.bf16.msra.mxu0 0
        %421 = vmatpush.bf16.msra.mxu0 0
        %422 = vmatpush.bf16.msra.mxu0 0
        %423 = vmatpush.bf16.msra.mxu0 %v411
        %424 = vmatpush.bf16.msra.mxu0 %v410
        %425 = vmatmul.bf16.gmra.mxu0 %v415
        %v426 = vpop.f32.mrf.mxu0
        %v427 = vadd.f32 0.0, %v426
        %v428 = vpop.f32.mrf.mxu0
        %429 = vdwg.mxu0
        %v430 = vmul.f32 %v427, 0.35355338
        %v431 = vperm.slane %v362, 2
        %433 = vrot.lane.b32.xlu0 %v431, 64
        %v434 = vpop.permute.xlu0 %433
        %v436 = vadd.f32 %v427, %v434
        %438 = vrot.lane.b32.xlu0 %v430, 120
        %v439 = vpop.permute.xlu0 %438
        %441 = vrot.lane.b32.xlu0 %v430, 112
        %v442 = vpop.permute.xlu0 %441
        %444 = vrot.lane.b32.xlu0 %v430, 104
        %v445 = vpop.permute.xlu0 %444
        %v447 = vrot.slane %v442, 4
        %vm448 = vcmask 1047556
        %v449 = vsel %vm448, %v447, %v430
        %v450 = vrot.slane %v430, 4
        %v451 = vsel %vm448, %v442, %v450
        %v453 = vunpack.c.l.s4 1983009808
        %v454 = vunpack.c.0.s8 %v453
        %v455 = vperm.slane %v449, %v454
        %v457 = vunpack.c.l.s4 1983009808
        %v458 = vunpack.c.0.s8 %v457
        %v459 = vperm.slane %v451, %v458
        %v460 = vrot.slane %v445, 4
        %v461 = vsel %vm448, %v460, %v439
        %v462 = vrot.slane %v439, 4
        %v463 = vsel %vm448, %v445, %v462
        %v465 = vunpack.c.l.s4 1983009808
        %v466 = vunpack.c.0.s8 %v465
        %v467 = vperm.slane %v461, %v466
        %v469 = vunpack.c.l.s4 1983009808
        %v470 = vunpack.c.0.s8 %v469
        %v471 = vperm.slane %v463, %v470
        %v472 = vrot.slane %v467, 4
        %v473 = vsel %vm448, %v472, %v455
        %v474 = vrot.slane %v455, 4
        %v475 = vsel %vm448, %v467, %v474
        %v477 = vunpack.c.l.s4 1934713408
        %v478 = vunpack.c.0.s8 %v477
        %v479 = vperm.slane %v473, %v478
        %v481 = vunpack.c.l.s4 1934713408
        %v482 = vunpack.c.0.s8 %v481
        %v483 = vperm.slane %v475, %v482
        %v484 = vrot.slane %v471, 4
        %v485 = vsel %vm448, %v484, %v459
        %v486 = vrot.slane %v459, 4
        %v487 = vsel %vm448, %v471, %v486
        %v489 = vunpack.c.l.s4 1934713408
        %v490 = vunpack.c.0.s8 %v489
        %v491 = vperm.slane %v485, %v490
        %v493 = vunpack.c.l.s4 1934713408
        %v494 = vunpack.c.0.s8 %v493
        %v495 = vperm.slane %v487, %v494
        %v496 = vrot.slane %v479, 4
        %v497 = vsel %vm448, 0.0, %v496
        %v498 = vrot.slane %v483, 4
        %v499 = vsel %vm448, 0.0, %v498
        %v500 = vrot.slane %v491, 4
        %v501 = vsel %vm448, 0.0, %v500
        %v502 = vrot.slane %v495, 4
        %v503 = vsel %vm448, 0.0, %v502
        %v504 = vsel %vm448, %v498, %v479
        %v506 = vunpack.c.l.s4 1983009808
        %v507 = vunpack.c.0.s8 %v506
        %v508 = vperm.slane %v504, %v507
        %v509 = vrot.slane %v499, 4
        %v510 = vsel %vm448, %v509, %v497
        %v512 = vunpack.c.l.s4 1983009808
        %v513 = vunpack.c.0.s8 %v512
        %v514 = vperm.slane %v510, %v513
        %v515 = vsel %vm448, %v502, %v491
        %v517 = vunpack.c.l.s4 1983009808
        %v518 = vunpack.c.0.s8 %v517
        %v519 = vperm.slane %v515, %v518
        %v520 = vrot.slane %v503, 4
        %v521 = vsel %vm448, %v520, %v501
        %v523 = vunpack.c.l.s4 1983009808
        %v524 = vunpack.c.0.s8 %v523
        %v525 = vperm.slane %v521, %v524
        %v526 = vrot.slane %v514, 4
        %v527 = vsel %vm448, %v526, %v508
        %v528 = vrot.slane %v508, 4
        %v529 = vsel %vm448, %v514, %v528
        %v531 = vunpack.c.l.s4 1934713408
        %v532 = vunpack.c.0.s8 %v531
        %v533 = vperm.slane %v527, %v532
        %v535 = vunpack.c.l.s4 1934713408
        %v536 = vunpack.c.0.s8 %v535
        %v537 = vperm.slane %v529, %v536
        %v538 = vrot.slane %v525, 4
        %v539 = vsel %vm448, %v538, %v519
        %v540 = vrot.slane %v519, 4
        %v541 = vsel %vm448, %v525, %v540
        %v543 = vunpack.c.l.s4 1934713408
        %v544 = vunpack.c.0.s8 %v543
        %v545 = vperm.slane %v539, %v544
        %v547 = vunpack.c.l.s4 1934713408
        %v548 = vunpack.c.0.s8 %v547
        %v549 = vperm.slane %v541, %v548
        %v550 = vrot.slane %v545, 4
        %v551 = vsel %vm448, %v550, %v533
        %v552 = vrot.slane %v533, 4
        %v553 = vsel %vm448, %v545, %v552
        %v554 = vrot.slane %v549, 4
        %v555 = vsel %vm448, %v554, %v537
        %v556 = vrot.slane %v537, 4
        %v557 = vsel %vm448, %v549, %v556
        %v558 = vpack.c.bf16 %v551, %v551
        %v559 = vpack.c.bf16 %v553, %v553
        %v560 = vpack.c.bf16 %v555, %v555
        %v561 = vpack.c.bf16 %v557, %v557
        %563 = vrot.lane.b32.xlu0 %v427, 120
        %v564 = vpop.permute.xlu0 %563
        %565 = vrot.lane.b32.xlu0 %v427, 112
        %v566 = vpop.permute.xlu0 %565
        %567 = vrot.lane.b32.xlu0 %v427, 104
        %v568 = vpop.permute.xlu0 %567
        %569 = vrot.lane.b32.xlu0 %v427, 96
        %v570 = vpop.permute.xlu0 %569
        %571 = vrot.lane.b32.xlu0 %v564, 96
        %v572 = vpop.permute.xlu0 %571
        %573 = vrot.lane.b32.xlu0 %v566, 96
        %v574 = vpop.permute.xlu0 %573
        %575 = vrot.lane.b32.xlu0 %v568, 96
        %v576 = vpop.permute.xlu0 %575
        %v581 = vrot.slane %v574, 4
        %v582 = vsel %vm448, %v581, %v570
        %v583 = vrot.slane %v570, 4
        %v584 = vsel %vm448, %v574, %v583
        %v586 = vunpack.c.l.s4 1983009808
        %v587 = vunpack.c.0.s8 %v586
        %v588 = vperm.slane %v582, %v587
        %v590 = vunpack.c.l.s4 1983009808
        %v591 = vunpack.c.0.s8 %v590
        %v592 = vperm.slane %v584, %v591
        %v593 = vrot.slane %v576, 4
        %v594 = vsel %vm448, %v593, %v572
        %v595 = vrot.slane %v572, 4
        %v596 = vsel %vm448, %v576, %v595
        %v598 = vunpack.c.l.s4 1983009808
        %v599 = vunpack.c.0.s8 %v598
        %v600 = vperm.slane %v594, %v599
        %v602 = vunpack.c.l.s4 1983009808
        %v603 = vunpack.c.0.s8 %v602
        %v604 = vperm.slane %v596, %v603
        %v605 = vrot.slane %v600, 4
        %v606 = vsel %vm448, %v605, %v588
        %v607 = vrot.slane %v588, 4
        %v608 = vsel %vm448, %v600, %v607
        %v610 = vunpack.c.l.s4 1934713408
        %v611 = vunpack.c.0.s8 %v610
        %v612 = vperm.slane %v606, %v611
        %v614 = vunpack.c.l.s4 1934713408
        %v615 = vunpack.c.0.s8 %v614
        %v616 = vperm.slane %v608, %v615
        %v617 = vrot.slane %v604, 4
        %v618 = vsel %vm448, %v617, %v592
        %v619 = vrot.slane %v592, 4
        %v620 = vsel %vm448, %v604, %v619
        %v622 = vunpack.c.l.s4 1934713408
        %v623 = vunpack.c.0.s8 %v622
        %v624 = vperm.slane %v618, %v623
        %v626 = vunpack.c.l.s4 1934713408
        %v627 = vunpack.c.0.s8 %v626
        %v628 = vperm.slane %v620, %v627
        %v629 = vrot.slane %v612, 4
        %v630 = vsel %vm448, 0.0, %v629
        %v631 = vrot.slane %v616, 4
        %v632 = vsel %vm448, 0.0, %v631
        %v633 = vrot.slane %v624, 4
        %v634 = vsel %vm448, 0.0, %v633
        %v635 = vrot.slane %v628, 4
        %v636 = vsel %vm448, 0.0, %v635
        %v637 = vsel %vm448, %v631, %v612
        %v639 = vunpack.c.l.s4 1983009808
        %v640 = vunpack.c.0.s8 %v639
        %v641 = vperm.slane %v637, %v640
        %v642 = vrot.slane %v632, 4
        %v643 = vsel %vm448, %v642, %v630
        %v645 = vunpack.c.l.s4 1983009808
        %v646 = vunpack.c.0.s8 %v645
        %v647 = vperm.slane %v643, %v646
        %v648 = vsel %vm448, %v635, %v624
        %v650 = vunpack.c.l.s4 1983009808
        %v651 = vunpack.c.0.s8 %v650
        %v652 = vperm.slane %v648, %v651
        %v653 = vrot.slane %v636, 4
        %v654 = vsel %vm448, %v653, %v634
        %v656 = vunpack.c.l.s4 1983009808
        %v657 = vunpack.c.0.s8 %v656
        %v658 = vperm.slane %v654, %v657
        %v659 = vrot.slane %v647, 4
        %v660 = vsel %vm448, %v659, %v641
        %v661 = vrot.slane %v641, 4
        %v662 = vsel %vm448, %v647, %v661
        %v664 = vunpack.c.l.s4 1934713408
        %v665 = vunpack.c.0.s8 %v664
        %v666 = vperm.slane %v660, %v665
        %v668 = vunpack.c.l.s4 1934713408
        %v669 = vunpack.c.0.s8 %v668
        %v670 = vperm.slane %v662, %v669
        %v671 = vrot.slane %v658, 4
        %v672 = vsel %vm448, %v671, %v652
        %v673 = vrot.slane %v652, 4
        %v674 = vsel %vm448, %v658, %v673
        %v676 = vunpack.c.l.s4 1934713408
        %v677 = vunpack.c.0.s8 %v676
        %v678 = vperm.slane %v672, %v677
        %v680 = vunpack.c.l.s4 1934713408
        %v681 = vunpack.c.0.s8 %v680
        %v682 = vperm.slane %v674, %v681
        %v683 = vrot.slane %v678, 4
        %v684 = vsel %vm448, %v683, %v666
        %v685 = vrot.slane %v666, 4
        %v686 = vsel %vm448, %v678, %v685
        %v687 = vrot.slane %v682, 4
        %v688 = vsel %vm448, %v687, %v670
        %v689 = vrot.slane %v670, 4
        %v690 = vsel %vm448, %v682, %v689
        %v691 = vpack.c.bf16 %v684, %v684
        %v692 = vpack.c.bf16 %v686, %v686
        %v693 = vpack.c.bf16 %v688, %v688
        %v694 = vpack.c.bf16 %v690, %v690
        %696 = vrot.lane.b32.xlu0 %v436, 120
        %v697 = vpop.permute.xlu0 %696
        %698 = vrot.lane.b32.xlu0 %v436, 112
        %v699 = vpop.permute.xlu0 %698
        %700 = vrot.lane.b32.xlu0 %v436, 104
        %v701 = vpop.permute.xlu0 %700
        %702 = vrot.lane.b32.xlu0 %v436, 64
        %v703 = vpop.permute.xlu0 %702
        %704 = vrot.lane.b32.xlu0 %v697, 64
        %v705 = vpop.permute.xlu0 %704
        %706 = vrot.lane.b32.xlu0 %v699, 64
        %v707 = vpop.permute.xlu0 %706
        %708 = vrot.lane.b32.xlu0 %v701, 64
        %v709 = vpop.permute.xlu0 %708
        %v714 = vrot.slane %v707, 4
        %v715 = vsel %vm448, %v714, %v703
        %v716 = vrot.slane %v703, 4
        %v717 = vsel %vm448, %v707, %v716
        %v719 = vunpack.c.l.s4 1983009808
        %v720 = vunpack.c.0.s8 %v719
        %v721 = vperm.slane %v715, %v720
        %v723 = vunpack.c.l.s4 1983009808
        %v724 = vunpack.c.0.s8 %v723
        %v725 = vperm.slane %v717, %v724
        %v726 = vrot.slane %v709, 4
        %v727 = vsel %vm448, %v726, %v705
        %v728 = vrot.slane %v705, 4
        %v729 = vsel %vm448, %v709, %v728
        %v731 = vunpack.c.l.s4 1983009808
        %v732 = vunpack.c.0.s8 %v731
        %v733 = vperm.slane %v727, %v732
        %v735 = vunpack.c.l.s4 1983009808
        %v736 = vunpack.c.0.s8 %v735
        %v737 = vperm.slane %v729, %v736
        %v738 = vrot.slane %v733, 4
        %v739 = vsel %vm448, %v738, %v721
        %v740 = vrot.slane %v721, 4
        %v741 = vsel %vm448, %v733, %v740
        %v743 = vunpack.c.l.s4 1934713408
        %v744 = vunpack.c.0.s8 %v743
        %v745 = vperm.slane %v739, %v744
        %v747 = vunpack.c.l.s4 1934713408
        %v748 = vunpack.c.0.s8 %v747
        %v749 = vperm.slane %v741, %v748
        %v750 = vrot.slane %v737, 4
        %v751 = vsel %vm448, %v750, %v725
        %v752 = vrot.slane %v725, 4
        %v753 = vsel %vm448, %v737, %v752
        %v755 = vunpack.c.l.s4 1934713408
        %v756 = vunpack.c.0.s8 %v755
        %v757 = vperm.slane %v751, %v756
        %v759 = vunpack.c.l.s4 1934713408
        %v760 = vunpack.c.0.s8 %v759
        %v761 = vperm.slane %v753, %v760
        %v762 = vrot.slane %v745, 4
        %v763 = vsel %vm448, 0.0, %v762
        %v764 = vrot.slane %v749, 4
        %v765 = vsel %vm448, 0.0, %v764
        %v766 = vrot.slane %v757, 4
        %v767 = vsel %vm448, 0.0, %v766
        %v768 = vrot.slane %v761, 4
        %v769 = vsel %vm448, 0.0, %v768
        %v770 = vsel %vm448, %v764, %v745
        %v772 = vunpack.c.l.s4 1983009808
        %v773 = vunpack.c.0.s8 %v772
        %v774 = vperm.slane %v770, %v773
        %v775 = vrot.slane %v765, 4
        %v776 = vsel %vm448, %v775, %v763
        %v778 = vunpack.c.l.s4 1983009808
        %v779 = vunpack.c.0.s8 %v778
        %v780 = vperm.slane %v776, %v779
        %v781 = vsel %vm448, %v768, %v757
        %v783 = vunpack.c.l.s4 1983009808
        %v784 = vunpack.c.0.s8 %v783
        %v785 = vperm.slane %v781, %v784
        %v786 = vrot.slane %v769, 4
        %v787 = vsel %vm448, %v786, %v767
        %v789 = vunpack.c.l.s4 1983009808
        %v790 = vunpack.c.0.s8 %v789
        %v791 = vperm.slane %v787, %v790
        %v792 = vrot.slane %v780, 4
        %v793 = vsel %vm448, %v792, %v774
        %v794 = vrot.slane %v774, 4
        %v795 = vsel %vm448, %v780, %v794
        %v797 = vunpack.c.l.s4 1934713408
        %v798 = vunpack.c.0.s8 %v797
        %v799 = vperm.slane %v793, %v798
        %v801 = vunpack.c.l.s4 1934713408
        %v802 = vunpack.c.0.s8 %v801
        %v803 = vperm.slane %v795, %v802
        %v804 = vrot.slane %v791, 4
        %v805 = vsel %vm448, %v804, %v785
        %v806 = vrot.slane %v785, 4
        %v807 = vsel %vm448, %v791, %v806
        %v809 = vunpack.c.l.s4 1934713408
        %v810 = vunpack.c.0.s8 %v809
        %v811 = vperm.slane %v805, %v810
        %v813 = vunpack.c.l.s4 1934713408
        %v814 = vunpack.c.0.s8 %v813
        %v815 = vperm.slane %v807, %v814
        %v816 = vrot.slane %v811, 4
        %v817 = vsel %vm448, %v816, %v799
        %v818 = vrot.slane %v799, 4
        %v819 = vsel %vm448, %v811, %v818
        %v820 = vrot.slane %v815, 4
        %v821 = vsel %vm448, %v820, %v803
        %v822 = vrot.slane %v803, 4
        %v823 = vsel %vm448, %v815, %v822
        %v824 = vpack.c.bf16 %v817, %v817
        %v825 = vpack.c.bf16 %v819, %v819
        %v826 = vpack.c.bf16 %v821, %v821
        %v827 = vpack.c.bf16 %v823, %v823
        %vm828 = vcmask 64512
        %v830 = vsel %vm828, %v558, 0
        %v833 = vsel %vm828, %v691, 0
        %835 = vmatpush.bf16.xpose.msra.mxu0 0
        %836 = vmatpush.bf16.xpose.msra.mxu0 0
        %837 = vmatpush.bf16.xpose.msra.mxu0 0
        %838 = vmatpush.bf16.xpose.msra.mxu0 0
        %839 = vmatpush.bf16.xpose.msra.mxu0 0
        %840 = vmatpush.bf16.xpose.msra.mxu0 0
        %841 = vmatpush.bf16.xpose.msra.mxu0 0
        %842 = vmatpush.bf16.xpose.msra.mxu0 %v833
        %843 = vmatmul.bf16.gmra.mxu0 %v830
        %v844 = vpop.f32.mrf.mxu0
        %v845 = vadd.f32 0.0, %v844
        %v846 = vpop.f32.mrf.mxu0
        %847 = vdwg.mxu0
        %v849 = vsel %vm828, %v559, 0
        %v852 = vsel %vm828, %v692, 0
        %854 = vmatpush.bf16.xpose.msra.mxu0 0
        %855 = vmatpush.bf16.xpose.msra.mxu0 0
        %856 = vmatpush.bf16.xpose.msra.mxu0 0
        %857 = vmatpush.bf16.xpose.msra.mxu0 0
        %858 = vmatpush.bf16.xpose.msra.mxu0 0
        %859 = vmatpush.bf16.xpose.msra.mxu0 0
        %860 = vmatpush.bf16.xpose.msra.mxu0 0
        %861 = vmatpush.bf16.xpose.msra.mxu0 %v852
        %862 = vmatmul.bf16.gmra.mxu0 %v849
        %v863 = vpop.f32.mrf.mxu0
        %v864 = vadd.f32 0.0, %v863
        %v865 = vpop.f32.mrf.mxu0
        %866 = vdwg.mxu0
        %v868 = vsel %vm828, %v560, 0
        %v871 = vsel %vm828, %v693, 0
        %873 = vmatpush.bf16.xpose.msra.mxu0 0
        %874 = vmatpush.bf16.xpose.msra.mxu0 0
        %875 = vmatpush.bf16.xpose.msra.mxu0 0
        %876 = vmatpush.bf16.xpose.msra.mxu0 0
        %877 = vmatpush.bf16.xpose.msra.mxu0 0
        %878 = vmatpush.bf16.xpose.msra.mxu0 0
        %879 = vmatpush.bf16.xpose.msra.mxu0 0
        %880 = vmatpush.bf16.xpose.msra.mxu0 %v871
        %881 = vmatmul.bf16.gmra.mxu0 %v868
        %v882 = vpop.f32.mrf.mxu0
        %v883 = vadd.f32 0.0, %v882
        %v884 = vpop.f32.mrf.mxu0
        %885 = vdwg.mxu0
        %v887 = vsel %vm828, %v561, 0
        %v890 = vsel %vm828, %v694, 0
        %892 = vmatpush.bf16.xpose.msra.mxu0 0
        %893 = vmatpush.bf16.xpose.msra.mxu0 0
        %894 = vmatpush.bf16.xpose.msra.mxu0 0
        %895 = vmatpush.bf16.xpose.msra.mxu0 0
        %896 = vmatpush.bf16.xpose.msra.mxu0 0
        %897 = vmatpush.bf16.xpose.msra.mxu0 0
        %898 = vmatpush.bf16.xpose.msra.mxu0 0
        %899 = vmatpush.bf16.xpose.msra.mxu0 %v890
        %900 = vmatmul.bf16.gmra.mxu0 %v887
        %v901 = vpop.f32.mrf.mxu0
        %v902 = vadd.f32 0.0, %v901
        %v903 = vpop.f32.mrf.mxu0
        %904 = vdwg.mxu0
        %v905 = vsel %vm828, %v845, -inf
        %906 = vmax.xlane.f32.xlu0 %v905
        %v907 = vpop.xlane.xlu0 %906
        %v908 = vsel %vm828, %v864, -inf
        %909 = vmax.xlane.f32.xlu0 %v908
        %v910 = vpop.xlane.xlu0 %909
        %v911 = vsel %vm828, %v883, -inf
        %912 = vmax.xlane.f32.xlu0 %v911
        %v913 = vpop.xlane.xlu0 %912
        %v914 = vsel %vm828, %v902, -inf
        %915 = vmax.xlane.f32.xlu0 %v914
        %v916 = vpop.xlane.xlu0 %915
        %v917 = vsub.f32 %v845, %v907
        %v918 = vsub.f32 %v864, %v910
        %v919 = vsub.f32 %v883, %v913
        %v920 = vsub.f32 %v902, %v916
        %v921 = vmul.f32 %v917, 1.442695
        %v922 = vpow.pop %v921
        %v923 = vmul.f32 %v918, 1.442695
        %v924 = vpow.pop %v923
        %v925 = vmul.f32 %v919, 1.442695
        %v926 = vpow.pop %v925
        %v927 = vmul.f32 %v920, 1.442695
        %v928 = vpow.pop %v927
        %v929 = vsel %vm828, %v922, 0.0
        %930 = vadd.xlane.f32.xlu0 %v929
        %v931 = vpop.xlane.xlu0 %930
        %v932 = vsel %vm828, %v924, 0.0
        %933 = vadd.xlane.f32.xlu0 %v932
        %v934 = vpop.xlane.xlu0 %933
        %v935 = vsel %vm828, %v926, 0.0
        %936 = vadd.xlane.f32.xlu0 %v935
        %v937 = vpop.xlane.xlu0 %936
        %v938 = vsel %vm828, %v928, 0.0
        %939 = vadd.xlane.f32.xlu0 %v938
        %v940 = vpop.xlane.xlu0 %939
        %v941 = vrcp.pop %v931
        %v942 = vrcp.pop %v934
        %v943 = vrcp.pop %v937
        %v944 = vrcp.pop %v940
        %v945 = vmul.f32 %v922, %v941
        %v946 = vmul.f32 %v924, %v942
        %v947 = vmul.f32 %v926, %v943
        %v948 = vmul.f32 %v928, %v944
        %949 = vst.msk [vmem:[%s327] sm:$0xff] %vm828, %v945
        %950 = vst.msk [vmem:[%s327 + $0x8] sm:$0xff] %vm828, %v946
        %951 = vst.msk [vmem:[%s327 + $0x10] sm:$0xff] %vm828, %v947
        %952 = vst.msk [vmem:[%s327 + $0x18] sm:$0xff] %vm828, %v948
        %v953 = vpack.c.bf16 %v945, %v945
        %v954 = vpack.c.bf16 %v946, %v946
        %v955 = vpack.c.bf16 %v947, %v947
        %v956 = vpack.c.bf16 %v948, %v948
        %v958 = vsel %vm828, %v953, 0
        %vm960 = vcmask 1043456
        %v962 = vsel %vm960, %v824, 0
        %964 = vmatpush.bf16.msra.mxu0 0
        %965 = vmatpush.bf16.msra.mxu0 0
        %966 = vmatpush.bf16.msra.mxu0 0
        %967 = vmatpush.bf16.msra.mxu0 0
        %968 = vmatpush.bf16.msra.mxu0 0
        %969 = vmatpush.bf16.msra.mxu0 0
        %970 = vmatpush.bf16.msra.mxu0 0
        %971 = vmatpush.bf16.msra.mxu0 %v962
        %972 = vmatmul.bf16.gmra.mxu0 %v958
        %v973 = vpop.f32.mrf.mxu0
        %v974 = vadd.f32 0.0, %v973
        %v975 = vpop.f32.mrf.mxu0
        %976 = vdwg.mxu0
        %v978 = vsel %vm828, %v954, 0
        %v981 = vsel %vm960, %v825, 0
        %983 = vmatpush.bf16.msra.mxu0 0
        %984 = vmatpush.bf16.msra.mxu0 0
        %985 = vmatpush.bf16.msra.mxu0 0
        %986 = vmatpush.bf16.msra.mxu0 0
        %987 = vmatpush.bf16.msra.mxu0 0
        %988 = vmatpush.bf16.msra.mxu0 0
        %989 = vmatpush.bf16.msra.mxu0 0
        %990 = vmatpush.bf16.msra.mxu0 %v981
        %991 = vmatmul.bf16.gmra.mxu0 %v978
        %v992 = vpop.f32.mrf.mxu0
        %v993 = vadd.f32 0.0, %v992
        %v994 = vpop.f32.mrf.mxu0
        %995 = vdwg.mxu0
        %v997 = vsel %vm828, %v955, 0
        %v1000 = vsel %vm960, %v826, 0
        %1002 = vmatpush.bf16.msra.mxu0 0
        %1003 = vmatpush.bf16.msra.mxu0 0
        %1004 = vmatpush.bf16.msra.mxu0 0
        %1005 = vmatpush.bf16.msra.mxu0 0
        %1006 = vmatpush.bf16.msra.mxu0 0
        %1007 = vmatpush.bf16.msra.mxu0 0
        %1008 = vmatpush.bf16.msra.mxu0 0
        %1009 = vmatpush.bf16.msra.mxu0 %v1000
        %1010 = vmatmul.bf16.gmra.mxu0 %v997
        %v1011 = vpop.f32.mrf.mxu0
        %v1012 = vadd.f32 0.0, %v1011
        %v1013 = vpop.f32.mrf.mxu0
        %1014 = vdwg.mxu0
        %v1016 = vsel %vm828, %v956, 0
        %v1019 = vsel %vm960, %v827, 0
        %1021 = vmatpush.bf16.msra.mxu0 0
        %1022 = vmatpush.bf16.msra.mxu0 0
        %1023 = vmatpush.bf16.msra.mxu0 0
        %1024 = vmatpush.bf16.msra.mxu0 0
        %1025 = vmatpush.bf16.msra.mxu0 0
        %1026 = vmatpush.bf16.msra.mxu0 0
        %1027 = vmatpush.bf16.msra.mxu0 0
        %1028 = vmatpush.bf16.msra.mxu0 %v1019
        %1029 = vmatmul.bf16.gmra.mxu0 %v1016
        %v1030 = vpop.f32.mrf.mxu0
        %v1031 = vadd.f32 0.0, %v1030
        %v1032 = vpop.f32.mrf.mxu0
        %1033 = vdwg.mxu0
        %v1034 = vrot.slane %v1012, 4
        %v1035 = vsel %vm448, %v1034, %v974
        %v1036 = vrot.slane %v974, 4
        %v1037 = vsel %vm448, %v1012, %v1036
        %v1039 = vunpack.c.l.s4 1983009808
        %v1040 = vunpack.c.0.s8 %v1039
        %v1041 = vperm.slane %v1035, %v1040
        %v1043 = vunpack.c.l.s4 1983009808
        %v1044 = vunpack.c.0.s8 %v1043
        %v1045 = vperm.slane %v1037, %v1044
        %v1046 = vrot.slane %v1031, 4
        %v1047 = vsel %vm448, %v1046, %v993
        %v1048 = vrot.slane %v993, 4
        %v1049 = vsel %vm448, %v1031, %v1048
        %v1051 = vunpack.c.l.s4 1983009808
        %v1052 = vunpack.c.0.s8 %v1051
        %v1053 = vperm.slane %v1047, %v1052
        %v1055 = vunpack.c.l.s4 1983009808
        %v1056 = vunpack.c.0.s8 %v1055
        %v1057 = vperm.slane %v1049, %v1056
        %v1058 = vrot.slane %v1053, 4
        %v1059 = vsel %vm448, %v1058, %v1041
        %v1060 = vrot.slane %v1041, 4
        %v1061 = vsel %vm448, %v1053, %v1060
        %v1063 = vunpack.c.l.s4 1934713408
        %v1064 = vunpack.c.0.s8 %v1063
        %v1065 = vperm.slane %v1059, %v1064
        %v1067 = vunpack.c.l.s4 1934713408
        %v1068 = vunpack.c.0.s8 %v1067
        %v1069 = vperm.slane %v1061, %v1068
        %v1070 = vrot.slane %v1057, 4
        %v1071 = vsel %vm448, %v1070, %v1045
        %v1072 = vrot.slane %v1045, 4
        %v1073 = vsel %vm448, %v1057, %v1072
        %v1075 = vunpack.c.l.s4 1934713408
        %v1076 = vunpack.c.0.s8 %v1075
        %v1077 = vperm.slane %v1071, %v1076
        %v1079 = vunpack.c.l.s4 1934713408
        %v1080 = vunpack.c.0.s8 %v1079
        %v1081 = vperm.slane %v1073, %v1080
        %v1082 = vrot.slane %v1065, 4
        %v1083 = vsel %vm448, 0.0, %v1082
        %v1084 = vrot.slane %v1069, 4
        %v1085 = vsel %vm448, 0.0, %v1084
        %v1086 = vrot.slane %v1077, 4
        %v1087 = vsel %vm448, 0.0, %v1086
        %v1088 = vrot.slane %v1081, 4
        %v1089 = vsel %vm448, 0.0, %v1088
        %v1090 = vsel %vm448, %v1084, %v1065
        %v1092 = vunpack.c.l.s4 1983009808
        %v1093 = vunpack.c.0.s8 %v1092
        %v1094 = vperm.slane %v1090, %v1093
        %v1095 = vrot.slane %v1085, 4
        %v1096 = vsel %vm448, %v1095, %v1083
        %v1098 = vunpack.c.l.s4 1983009808
        %v1099 = vunpack.c.0.s8 %v1098
        %v1100 = vperm.slane %v1096, %v1099
        %v1101 = vsel %vm448, %v1088, %v1077
        %v1103 = vunpack.c.l.s4 1983009808
        %v1104 = vunpack.c.0.s8 %v1103
        %v1105 = vperm.slane %v1101, %v1104
        %v1106 = vrot.slane %v1089, 4
        %v1107 = vsel %vm448, %v1106, %v1087
        %v1109 = vunpack.c.l.s4 1983009808
        %v1110 = vunpack.c.0.s8 %v1109
        %v1111 = vperm.slane %v1107, %v1110
        %v1112 = vrot.slane %v1100, 4
        %v1113 = vsel %vm448, %v1112, %v1094
        %v1114 = vrot.slane %v1094, 4
        %v1115 = vsel %vm448, %v1100, %v1114
        %v1117 = vunpack.c.l.s4 1934713408
        %v1118 = vunpack.c.0.s8 %v1117
        %v1119 = vperm.slane %v1113, %v1118
        %v1121 = vunpack.c.l.s4 1934713408
        %v1122 = vunpack.c.0.s8 %v1121
        %v1123 = vperm.slane %v1115, %v1122
        %v1124 = vrot.slane %v1111, 4
        %v1125 = vsel %vm448, %v1124, %v1105
        %v1126 = vrot.slane %v1105, 4
        %v1127 = vsel %vm448, %v1111, %v1126
        %v1129 = vunpack.c.l.s4 1934713408
        %v1130 = vunpack.c.0.s8 %v1129
        %v1131 = vperm.slane %v1125, %v1130
        %v1133 = vunpack.c.l.s4 1934713408
        %v1134 = vunpack.c.0.s8 %v1133
        %v1135 = vperm.slane %v1127, %v1134
        %v1136 = vrot.slane %v1131, 4
        %v1137 = vsel %vm448, %v1136, %v1119
        %v1138 = vrot.slane %v1119, 4
        %v1139 = vsel %vm448, %v1131, %v1138
        %v1140 = vrot.slane %v1135, 4
        %v1141 = vsel %vm448, %v1140, %v1123
        %v1142 = vrot.slane %v1123, 4
        %v1143 = vsel %vm448, %v1135, %v1142
        %1145 = vrot.lane.b32.xlu0 %v1139, 8
        %v1146 = vpop.permute.xlu0 %1145
        %1149 = vrot.lane.b32.xlu0 %v1141, 16
        %v1150 = vpop.permute.xlu0 %1149
        %1153 = vrot.lane.b32.xlu0 %v1143, 24
        %v1154 = vpop.permute.xlu0 %1153
        %v1156 = vsel %vm828, %v1137, %v1146
        %vm1157 = vcmask 130048
        %v1158 = vsel %vm1157, %v1156, %v1150
        %vm1159 = vcmask 195584
        %v1160 = vsel %vm1159, %v1158, %v1154
        %v1161 = vadd.f32 %v1160, %v361
        %v1162 = vsel %vm363, %v1161, 0.0
        %1163 = vadd.xlane.f32.xlu0 %v1162
        %v1164 = vpop.xlane.xlu0 %1163
        %v1165 = vmul.f32 %v1164, %v373
        %v1166 = vsub.f32 %v1161, %v1165
        %v1167 = vmul.f32 %v1166, %v1166
        %v1168 = vsel %vm363, %v1167, 0.0
        %1169 = vadd.xlane.f32.xlu0 %v1168
        %v1170 = vpop.xlane.xlu0 %1169
        %v1171 = vmul.f32 %v1170, %v373
        %v1172 = vadd.f32 %v1171, 1e-05
        %v1173 = vrsqrt.pop %v1172
        %v1174 = vmul.f32 %v1173, %v1172
        %v1175 = vmul.f32 %v1174, %v1173
        %v1176 = vmul.f32 0.5, %v1175
        %v1177 = vsub.f32 1.5, %v1176
        %v1178 = vmul.f32 %v1173, %v1177
        %vm1179 = vweird.f32 %v1172
        %vm1180 = vweird.f32 %v1173
        %vm1181 = vmor %vm1179, %vm1180
        %v1182 = vsel %vm1181, %v1173, %v1178
        %v1183 = vmul.f32 %v1166, %v1182
        %v1184 = vperm.slane %v362, 3
        %v1185 = vmul.f32 %v1183, %v1184
        %v1186 = vperm.slane %v362, 4
        %v1187 = vadd.f32 %v1185, %v1186
        %v1188 = vpack.c.bf16 %v1187, %v1187
        %v1189 = vld [vmem:[%s341] sm:$0xf]
        %v1190 = vld [vmem:[%s341 + $0x4] sm:$0xf]
        %v1191 = vld [vmem:[%s341 + $0x8] sm:$0xf]
        %v1192 = vld [vmem:[%s341 + $0xc] sm:$0xf]
        %v1193 = vperm.slane %v362, 6
        %v1198 = vunpack.c.l.b16 %v1189
        %v1199 = vunpack.c.l.b16 %v1190
        %v1200 = vunpack.c.l.b16 %v1191
        %v1201 = vunpack.c.l.b16 %v1192
        %v1202 = vpack.c.b16 %v1199, %v1198
        %v1203 = vpack.c.b16 %v1201, %v1200
        %v1207 = vsel %vm363, %v1188, 0
        %1209 = vmatpush.bf16.msra.mxu0 0
        %1210 = vmatpush.bf16.msra.mxu0 0
        %1211 = vmatpush.bf16.msra.mxu0 0
        %1212 = vmatpush.bf16.msra.mxu0 0
        %1213 = vmatpush.bf16.msra.mxu0 0
        %1214 = vmatpush.bf16.msra.mxu0 0
        %1215 = vmatpush.bf16.msra.mxu0 %v1203
        %1216 = vmatpush.bf16.msra.mxu0 %v1202
        %1217 = vmatmul.bf16.gmra.mxu0 %v1207
        %v1218 = vpop.f32.mrf.mxu0
        %v1219 = vadd.f32 %v1193, %v1218
        %v1220 = vpop.f32.mrf.mxu0
        %1221 = vdwg.mxu0
        %v1222 = vmul.f32 %v1219, 0.5
        %v1223 = vmul.f32 %v1219, 0.70710677
        %v1224 = vmul.f32 %v1223, %v1223
        %v1225 = vmin.f32 16.0, %v1224
        %v1226 = vmul.f32 %v1225, 2.1237322e-06
        %v1227 = vadd.f32 %v1226, 0.00028619796
        %v1228 = vmul.f32 %v1225, %v1227
        %v1229 = vadd.f32 %v1228, 0.0036580483
        %v1230 = vmul.f32 %v1225, %v1229
        %v1231 = vadd.f32 %v1230, 0.05243302
        %v1232 = vmul.f32 %v1225, %v1231
        %v1233 = vadd.f32 %v1232, 0.18741608
        %v1234 = vmul.f32 %v1225, %v1233
        %v1235 = vadd.f32 %v1234, 1.1283791
        %v1236 = vmul.f32 %v1223, %v1235
        %v1237 = vmul.f32 %v1225, 3.8918573e-05
        %v1238 = vadd.f32 %v1237, 0.001143296
        %v1239 = vmul.f32 %v1225, %v1238
        %v1240 = vadd.f32 %v1239, 0.014752088
        %v1241 = vmul.f32 %v1225, %v1240
        %v1242 = vadd.f32 %v1241, 0.112945676
        %v1243 = vmul.f32 %v1225, %v1242
        %v1244 = vadd.f32 %v1243, 0.4994258
        %v1245 = vmul.f32 %v1225, %v1244
        %v1246 = vadd.f32 %v1245, 1.0
        %v1247 = vrcp.pop %v1246
        %v1248 = vmul.f32 %v1246, %v1247
        %v1249 = vsub.f32 1.0, %v1248
        %v1250 = vmul.f32 %v1247, %v1249
        %v1251 = vadd.f32 %v1247, %v1250
        %vm1252 = vweird.f32 %v1246
        %vm1253 = vweird.f32 %v1247
        %vm1254 = vmor %vm1252, %vm1253
        %v1255 = vsel %vm1254, %v1247, %v1251
        %v1256 = vand.u32 2147483647, %v1246
        %vm1257 = vcmp.eq.f32.partialorder %v1256, 8.507059e+37
        %v1258 = vand.u32 %v1246, 2147483648
        %v1259 = vor.u32 1.1754944e-38, %v1258
        %v1260 = vsel %vm1257, %v1259, %v1255
        %v1261 = vmul.f32 %v1236, %v1260
        %v1262 = vmin.f32 %v1261, 1.0
        %v1263 = vmax.f32 %v1262, -1.0
        %v1264 = vadd.f32 %v1263, 1.0
        %v1265 = vmul.f32 %v1222, %v1264
        %v1266 = vpack.c.bf16 %v1265, %v1265
        %v1267 = vld [vmem:[%s346] sm:$0xf]
        %v1268 = vld [vmem:[%s346 + $0x4] sm:$0xf]
        %v1269 = vld [vmem:[%s346 + $0x8] sm:$0xf]
        %v1270 = vld [vmem:[%s346 + $0xc] sm:$0xf]
        %v1271 = vld [vmem:[%s346 + $0x10] sm:$0xf]
        %v1272 = vld [vmem:[%s346 + $0x14] sm:$0xf]
        %v1273 = vld [vmem:[%s346 + $0x18] sm:$0xf]
        %v1274 = vld [vmem:[%s346 + $0x1c] sm:$0xf]
        %v1275 = vld [vmem:[%s346 + $0x20] sm:$0xf]
        %v1276 = vld [vmem:[%s346 + $0x24] sm:$0xf]
        %v1277 = vld [vmem:[%s346 + $0x28] sm:$0xf]
        %v1278 = vld [vmem:[%s346 + $0x2c] sm:$0xf]
        %v1279 = vld [vmem:[%s346 + $0x30] sm:$0xf]
        %v1280 = vld [vmem:[%s346 + $0x34] sm:$0xf]
        %v1281 = vld [vmem:[%s346 + $0x38] sm:$0xf]
        %v1282 = vld [vmem:[%s346 + $0x3c] sm:$0xf]
        %v1283 = vperm.slane %v362, 5
        %v1300 = vunpack.c.l.b16 %v1267
        %v1301 = vunpack.c.l.b16 %v1268
        %v1302 = vunpack.c.l.b16 %v1269
        %v1303 = vunpack.c.l.b16 %v1270
        %v1304 = vunpack.c.l.b16 %v1271
        %v1305 = vunpack.c.l.b16 %v1272
        %v1306 = vunpack.c.l.b16 %v1273
        %v1307 = vunpack.c.l.b16 %v1274
        %v1308 = vunpack.c.l.b16 %v1275
        %v1309 = vunpack.c.l.b16 %v1276
        %v1310 = vunpack.c.l.b16 %v1277
        %v1311 = vunpack.c.l.b16 %v1278
        %v1312 = vunpack.c.l.b16 %v1279
        %v1313 = vunpack.c.l.b16 %v1280
        %v1314 = vunpack.c.l.b16 %v1281
        %v1315 = vunpack.c.l.b16 %v1282
        %v1316 = vpack.c.b16 %v1301, %v1300
        %v1317 = vpack.c.b16 %v1303, %v1302
        %v1318 = vpack.c.b16 %v1305, %v1304
        %v1319 = vpack.c.b16 %v1307, %v1306
        %v1320 = vpack.c.b16 %v1309, %v1308
        %v1321 = vpack.c.b16 %v1311, %v1310
        %v1322 = vpack.c.b16 %v1313, %v1312
        %v1323 = vpack.c.b16 %v1315, %v1314
        %1332 = vmatpush.bf16.msra.mxu0 %v1323
        %1333 = vmatpush.bf16.msra.mxu0 %v1322
        %1334 = vmatpush.bf16.msra.mxu0 %v1321
        %1335 = vmatpush.bf16.msra.mxu0 %v1320
        %1336 = vmatpush.bf16.msra.mxu0 %v1319
        %1337 = vmatpush.bf16.msra.mxu0 %v1318
        %1338 = vmatpush.bf16.msra.mxu0 %v1317
        %1339 = vmatpush.bf16.msra.mxu0 %v1316
        %1340 = vmatmul.bf16.gmra.mxu0 %v1266
        %v1341 = vpop.f32.mrf.mxu0
        %v1342 = vadd.f32 %v1283, %v1341
        %v1343 = vpop.f32.mrf.mxu0
        %1344 = vdwg.mxu0
        %v1345 = vadd.f32 %v1342, %v1161
        %1346 = vst.msk [vmem:[%s320] sm:$0xff] %vm363, %v1345
        %s1347 = sand.u32 %s174, 1
        %s1348 = scalar_lea.sflag [#allocation3], %s1347
        %s1349 = sand.u32 %s174, 1
        %s1350 = smul.addr %s1349, 8
        %s1351 = scalar_lea.vmem [#allocation2], %s1350
        %s1352 = sand.u32 %s204, 1
        %s1353 = scalar_lea.sflag [#allocation5], %s1352
        %s1354 = sand.u32 %s204, 1
        %s1355 = smul.addr %s1354, 32
        %s1356 = scalar_lea.vmem [#allocation4], %s1355
        // Predicated region
        $region45: #{tpu_custom_call.1} parent=39 // pred_check
          %p1357 = pneg %p184
        $region46: #{tpu_custom_call.1} parent=39 // pred_check_branch
          %1359 = sbr.rel (%p1357) target = $region48
        $region47: #{tpu_custom_call.1} parent=39 // pred_region
          %1361 = vsyncadd %s1348, 0
          %s1362 = smul.addr %s28, 8
          %s1363 = scalar_lea.hbm %s5, %s1362
          %s1365 = sshll.u32 %s1351, 4
          %s1366 = int_to_ptr.vmem [resolvable:$true] %s1365
          %s1367 = sshll.u32 %s1363, 4
          %s1368 = int_to_ptr.hbm [resolvable:$true] %s1367
          %1370 = dma.vmem_to_hbm [thread:$0]  %s1366, 128, %s1368, %s1348
        $region48: #{tpu_custom_call.1} parent=39 // pred_fallthru
          _
        // Predicated region
        $region49: #{tpu_custom_call.1} parent=39 // pred_check
          %p1371 = pneg %p214
        $region50: #{tpu_custom_call.1} parent=39 // pred_check_branch
          %1373 = sbr.rel (%p1371) target = $region52
        $region51: #{tpu_custom_call.1} parent=39 // pred_region
          %s1374 = smul.u32 %s29, 2
          %s1375 = sadd.s32 %s1374, %s28
          %1377 = vsyncadd %s1353, 0
          %s1378 = smul.addr %s1375, 4
          %s1379 = smul.addr %s1378, 8
          %s1380 = scalar_lea.hbm %s6, %s1379
          %s1381 = sshll.u32 %s1356, 4
          %s1382 = int_to_ptr.vmem [resolvable:$true] %s1381
          %s1383 = sshll.u32 %s1380, 4
          %s1384 = int_to_ptr.hbm [resolvable:$true] %s1383
          %1389 = dma.vmem_to_hbm [thread:$0]  %s1382, 512, %s1384, %s1353, 128, 128, 8
        $region52: #{tpu_custom_call.1} parent=39 // pred_fallthru
          _
      $region40: #{tpu_custom_call.1} parent=5 // pred_fallthru
        _
      %p1390 = scmp.le.s32.totalorder 2, %s19
      // Predicated region
      $region53: #{tpu_custom_call.1} parent=5 // pred_check
        %p1391 = pneg %p1390
      $region54: #{tpu_custom_call.1} parent=5 // pred_check_branch
        %1393 = sbr.rel (%p1391) target = $region56
      $region55: #{tpu_custom_call.1} parent=5 // pred_region
        %s1394 = ssub.s32 %s19, 2
        // Predicated region
        $region57: #{tpu_custom_call.1} parent=55 // pred_check
          %p1395 = pneg %p190
        $region58: #{tpu_custom_call.1} parent=55 // pred_check_branch
          %1397 = sbr.rel (%p1395) target = $region60
        $region59: #{tpu_custom_call.1} parent=55 // pred_region
          %s1398 = sand.u32 %s175, 1
          %s1399 = scalar_lea.sflag [#allocation3], %s1398
          %s1400 = sand.u32 %s175, 1
          %s1401 = smul.addr %s1400, 8
          %s1402 = scalar_lea.vmem [#allocation2], %s1401
          %1404 = dma.done %s1399, 128
        $region60: #{tpu_custom_call.1} parent=55 // pred_fallthru
          _
        // Predicated region
        $region61: #{tpu_custom_call.1} parent=55 // pred_check
          %p1405 = pneg %p220
        $region62: #{tpu_custom_call.1} parent=55 // pred_check_branch
          %1407 = sbr.rel (%p1405) target = $region64
        $region63: #{tpu_custom_call.1} parent=55 // pred_region
          %s1408 = sand.u32 %s205, 1
          %s1409 = scalar_lea.sflag [#allocation5], %s1408
          %s1410 = sand.u32 %s205, 1
          %s1411 = smul.addr %s1410, 32
          %s1412 = scalar_lea.vmem [#allocation4], %s1411
          %1414 = dma.done %s1409, 512
        $region64: #{tpu_custom_call.1} parent=55 // pred_fallthru
          _
      $region56: #{tpu_custom_call.1} parent=5 // pred_fallthru
        _
    $region6: #{tpu_custom_call.1} parent=1 // loop_footer
      %s23 = sadd.s32 1, %s19
    $region7: #{tpu_custom_call.1} parent=1 // loop_footer_branch
      %18 = sbr.rel target = $region3
    $region8: #{tpu_custom_call.1} parent=1 // loop_exit
      _
    %1415 = vsyncpa [#allocation3], 1
    %s1416 = scalar_lea.sflag [#allocation3], 1
    %1417 = vsyncpa %s1416, 1
    %1418 = vsyncpa [#allocation5], 1
    %s1419 = scalar_lea.sflag [#allocation5], 1
    %1420 = vsyncpa %s1419, 1

</llo_original>
